<compile_context>
chip_gen: v7x
topology: tpu7x:2x2x1
jax: 0.10.0
libtpu: 0.0.40
codegen_flags: <defaults>
</compile_context>

<pallas_src>
import functools

import jax
import jax.numpy as jnp
from jax.experimental import pallas as pl
from jax.experimental.pallas import tpu as pltpu

LN_EPS = 1e-5


# ---------------------------------------------------------------- math helpers
def _erf(x):
    # Abramowitz & Stegun 7.1.26 rational approximation (|err| < 1.5e-7).
    # Exact (erf-based) nn.GELU with only VPU/EUP ops; the divide goes to the EUP.
    a1, a2, a3, a4, a5 = 0.254829592, -0.284496736, 1.421413741, -1.453152027, 1.061405429
    p = 0.3275911
    s = jnp.where(x >= 0.0, 1.0, -1.0)
    ax = jnp.abs(x)
    t = pl.reciprocal(1.0 + p * ax, approx=True)
    poly = ((((a5 * t + a4) * t + a3) * t + a2) * t + a1) * t
    return s * (1.0 - poly * jnp.exp(-ax * ax))


def _gelu_exact(x):
    return 0.5 * x * (1.0 + _erf(x * 0.7071067811865476))


def _layernorm(x, gamma, beta):
    # gamma/beta: (1, E); x: (rows, E).  All f32.
    mu = jnp.mean(x, axis=-1, keepdims=True)
    xc = x - mu
    var = jnp.mean(xc * xc, axis=-1, keepdims=True)
    return xc * jax.lax.rsqrt(var + LN_EPS) * gamma + beta


# --------------------------------------------------- fused transformer kernel
def gpt_blocks_kernel(x_ref,
                      g1_ref, b1_ref, wqkv_ref, bqkv_ref, wo_ref, bo_ref,
                      g2_ref, b2_ref, wup_ref, bup_ref, wdn_ref, bdn_ref,
                      lng_ref, lnb_ref,
                      o_ref, x_sc, *, n_head, hidden):
    """Grid = (B, L).  One batch row per outer step; layer axis inner ("arbitrary").

    x is carried in the VMEM scratch `x_sc` across layer iterations; the output is
    the final-LayerNorm'ed LAST-token activation (the targets=None inference path).
    """
    layer = pl.program_id(1)
    n_layers = pl.num_programs(1)
    bf16 = jnp.bfloat16
    N, H = n_head, hidden
    NH = N * H
    inv_scale = 1.0 / (H ** 0.5)

    @pl.when(layer == 0)
    def _():
        x_sc[...] = x_ref[0].astype(jnp.float32)

    x = x_sc[...]                                             # (S, E) f32, VMEM-resident
    S, E = x.shape

    # ---- LayerNorm 1 (f32 stats)
    x1 = _layernorm(x, g1_ref[0], b1_ref[0])

    # ---- fused QKV: ONE MXU matmul against the original (E, 3*N*H) weight
    qkv = jnp.dot(x1.astype(bf16), wqkv_ref[0],
                  preferred_element_type=jnp.float32) + bqkv_ref[0]    # (S, 3NH) f32

    def heads(cols):                                          # (S, NH) -> (N, S, H) bf16
        return jnp.transpose(cols.reshape(S, N, H), (1, 0, 2)).astype(bf16)

    q = heads(qkv[:, 0 * NH:1 * NH])
    k = heads(qkv[:, 1 * NH:2 * NH])
    v = heads(qkv[:, 2 * NH:3 * NH])

    # ---- causal attention scores (heads batched in one contraction), softmax f32
    s = jnp.einsum('nqh,nkh->nqk', q, k,
                   preferred_element_type=jnp.float32) * inv_scale     # (N, S, S)
    row = jax.lax.broadcasted_iota(jnp.int32, (S, S), 0)
    col = jax.lax.broadcasted_iota(jnp.int32, (S, S), 1)
    s = jnp.where((row >= col)[None], s, -1e30)               # finite neg: NaN-safe
    s = s - jnp.max(s, axis=-1, keepdims=True)
    p = jnp.exp(s)
    p = p * pl.reciprocal(jnp.sum(p, axis=-1, keepdims=True), approx=True)
    # dropout(attn probs): eval mode -> identity

    # ---- PV, then head-sum folded into the out-projection (single matmul)
    o_h = jnp.einsum('nqk,nkh->qnh', p.astype(bf16), v,
                     preferred_element_type=jnp.float32)               # (S, N, H)
    attn = jnp.dot(o_h.reshape(S, NH).astype(bf16), wo_ref[0],
                   preferred_element_type=jnp.float32) + bo_ref[0]     # (S, E)
    # dropout(out_proj): eval mode -> identity

    # ---- residual 1, LayerNorm 2, FeedForward (up -> exact GELU -> down), residual 2
    x3 = attn + x
    x4 = _layernorm(x3, g2_ref[0], b2_ref[0])
    up = jnp.dot(x4.astype(bf16), wup_ref[0],
                 preferred_element_type=jnp.float32) + bup_ref[0]
    up = _gelu_exact(up)
    dn = jnp.dot(up.astype(bf16), wdn_ref[0],
                 preferred_element_type=jnp.float32) + bdn_ref[0]
    x_new = dn + x3
    x_sc[...] = x_new                                         # carry to next layer

    # ---- epilogue: final LayerNorm of the last token, written once per batch row
    @pl.when(layer == n_layers - 1)
    def _():
        xn = _layernorm(x_new[S - 1:S, :], lng_ref[...], lnb_ref[...])  # (1, E)
        o_ref[0] = xn.astype(o_ref.dtype)


def run_transformer(x, stacked, ln_g, ln_b, *, n_head, hidden):
    """x: (B, S, E) f32 -> (B, 1, E) f32 final-LN'ed last-token activations."""
    B, S, E = x.shape
    L = stacked[0].shape[0]

    def layer_spec(a):
        return pl.BlockSpec((1,) + tuple(a.shape[1:]),
                            lambda b, l, _nd=a.ndim: (l,) + (0,) * (_nd - 1))

    def const_spec(a):
        return pl.BlockSpec(tuple(a.shape),
                            lambda b, l, _nd=a.ndim: (0,) * _nd)

    kernel = functools.partial(gpt_blocks_kernel, n_head=n_head, hidden=hidden)
    return pl.pallas_call(
        kernel,
        out_shape=jax.ShapeDtypeStruct((B, 1, E), jnp.float32),
        grid=(B, L),
        in_specs=[pl.BlockSpec((1, S, E), lambda b, l: (b, 0, 0))]
                 + [layer_spec(p) for p in stacked]
                 + [const_spec(ln_g), const_spec(ln_b)],
        out_specs=pl.BlockSpec((1, 1, E), lambda b, l: (b, 0, 0)),
        scratch_shapes=[pltpu.VMEM((S, E), jnp.float32)],
        compiler_params=pltpu.CompilerParams(
            dimension_semantics=("parallel", "arbitrary")),
    )(x, *stacked, ln_g, ln_b)


# ------------------------------------------------------- lm_head (vocab-tiled)
def lm_head_kernel(xn_ref, w_ref, bias_ref, o_ref):
    # xn_ref: (B, E) already LayerNorm'ed; w_ref: (TILE_V, E) bf16 (untransposed).
    logits = jax.lax.dot_general(
        xn_ref[...].astype(jnp.bfloat16), w_ref[...],
        dimension_numbers=(((1,), (1,)), ((), ())),            # contract E; no .T materialized
        preferred_element_type=jnp.float32)                    # (B, TILE_V)
    o_ref[...] = (logits + bias_ref[...]).astype(o_ref.dtype)


def run_lm_head(xn, tok_emb_bf16, lm_bias, *, tile_v=None):
    B, E = xn.shape
    V = tok_emb_bf16.shape[0]
    if tile_v is None:
        tile_v = V if V <= 2048 else 2048     # lane-dense, HBM-roofline-friendly tiles
    assert V % tile_v == 0
    return pl.pallas_call(
        lm_head_kernel,
        out_shape=jax.ShapeDtypeStruct((B, V), jnp.float32),
        grid=(V // tile_v,),
        in_specs=[
            pl.BlockSpec((B, E), lambda j: (0, 0)),
            pl.BlockSpec((tile_v, E), lambda j: (j, 0)),       # vocab streamed across grid
            pl.BlockSpec((1, tile_v), lambda j: (0, j)),
        ],
        out_specs=pl.BlockSpec((B, tile_v), lambda j: (0, j)),
        compiler_params=pltpu.CompilerParams(dimension_semantics=("parallel",)),
    )(xn, tok_emb_bf16, lm_bias)


# ------------------------------------------------------------------ params
def init_params(key, cfg):
    """Master parameters in torch-equivalent layout (f32)."""
    E = cfg["embed"]; H = cfg["hidden"]; N = cfg["n_head"]
    F = cfg["expansion"] * E
    NH = N * H
    V = cfg["vocab"]

    def linear(k, din, dout):
        kw, kb = jax.random.split(k)
        w = jax.random.normal(kw, (din, dout), jnp.float32) * 0.02
        b = jax.random.normal(kb, (1, dout), jnp.float32) * 0.02
        return w, b

    keys = jax.random.split(key, 4 + 4 * cfg["n_block"])
    tok_emb = jax.random.normal(keys[0], (V, E), jnp.float32) * 0.02
    pos_emb = jax.random.normal(keys[1], (cfg["seq_len"], E), jnp.float32) * 0.02
    lm_bias = jax.random.normal(keys[2], (1, V), jnp.float32) * 0.02
    ln_g = jnp.ones((1, E), jnp.float32)
    ln_b = jnp.zeros((1, E), jnp.float32)

    blocks = []
    for i in range(cfg["n_block"]):
        k0, k1, k2, k3 = keys[4 + 4 * i: 8 + 4 * i]
        g1 = jnp.ones((1, E), jnp.float32); b1 = jnp.zeros((1, E), jnp.float32)
        g2 = jnp.ones((1, E), jnp.float32); b2 = jnp.zeros((1, E), jnp.float32)
        wqkv, bqkv = linear(k0, E, 3 * NH)
        wo, bo = linear(k1, NH, E)
        wup, bup = linear(k2, E, F)
        wdn, bdn = linear(k3, F, E)
        blocks.append((g1, b1, wqkv, bqkv, wo, bo, g2, b2, wup, bup, wdn, bdn))

    return dict(tok_emb=tok_emb, pos_emb=pos_emb, blocks=blocks,
                ln_g=ln_g, ln_b=ln_b, lm_bias=lm_bias)


def prepare_kernel_params(params, cfg):
    """One-time stack-over-layers + bf16 cast of weights for the fused kernel."""
    bf16 = jnp.bfloat16
    blocks = params["blocks"]

    def stack(i, cast=None):
        a = jnp.stack([blk[i] for blk in blocks], axis=0)
        return a.astype(cast) if cast is not None else a

    stacked = (
        stack(0),            # g1   (L, 1, E)
        stack(1),            # b1   (L, 1, E)
        stack(2, bf16),      # wqkv (L, E, 3NH)   original nn.Linear layout
        stack(3),            # bqkv (L, 1, 3NH)
        stack(4, bf16),      # wo   (L, NH, E)    original nn.Linear layout
        stack(5),            # bo   (L, 1, E)
        stack(6),            # g2
        stack(7),            # b2
        stack(8, bf16),      # wup  (L, E, F)
        stack(9),            # bup  (L, 1, F)
        stack(10, bf16),     # wdn  (L, F, E)
        stack(11),           # bdn  (L, 1, E)
    )
    return dict(tok_emb=params["tok_emb"],
                tok_emb_bf16=params["tok_emb"].astype(bf16),   # tied lm_head weight
                pos_emb=params["pos_emb"],
                stacked=stacked,
                ln_g=params["ln_g"], ln_b=params["ln_b"],
                lm_bias=params["lm_bias"])


# ------------------------------------------------------------------ model
def toygpt_forward(inputs, kparams, cfg):
    """inputs: int32 (B, S); returns (logits (B, 1, V), None) like targets=None path."""
    B, S = inputs.shape
    assert S <= cfg["seq_len"]
    # embedding gather = glue (data-dependent gather left outside the kernel)
    x = kparams["tok_emb"][inputs] + kparams["pos_emb"][jnp.arange(S)]
    # dropout: eval mode -> identity
    xn_last = run_transformer(x, kparams["stacked"], kparams["ln_g"], kparams["ln_b"],
                              n_head=cfg["n_head"], hidden=cfg["hidden"])   # (B, 1, E)
    # lm_head weight is tied to token embedding: logits = xn @ tok_emb.T + bias
    logits = run_lm_head(xn_last[:, 0, :], kparams["tok_emb_bf16"], kparams["lm_bias"])
    return logits[:, None, :], None


# -------------------------------------------------------- pure-JAX reference
def _reference_forward(inputs, params, cfg):
    B, S = inputs.shape
    N, H = cfg["n_head"], cfg["hidden"]
    x = params["tok_emb"][inputs] + params["pos_emb"][jnp.arange(S)]

    def ln(v, g, b):
        mu = v.mean(-1, keepdims=True)
        var = ((v - mu) ** 2).mean(-1, keepdims=True)
        return (v - mu) / jnp.sqrt(var + LN_EPS) * g[0] + b[0]

    for (g1, b1, wqkv, bqkv, wo, bo, g2, b2, wup, bup, wdn, bdn) in params["blocks"]:
        x1 = ln(x, g1, b1)
        qkv = x1 @ wqkv + bqkv[0]
        q, k, v = jnp.split(qkv, 3, axis=-1)
        q = q.reshape(B, S, N, H).transpose(0, 2, 1, 3)
        k = k.reshape(B, S, N, H).transpose(0, 2, 1, 3)
        v = v.reshape(B, S, N, H).transpose(0, 2, 1, 3)
        s = (q @ k.transpose(0, 1, 3, 2)) / (H ** 0.5)
        mask = jnp.tril(jnp.ones((S, S), bool))
        s = jnp.where(mask, s, -jnp.inf)
        p = jax.nn.softmax(s, axis=-1)
        a = (p @ v).transpose(0, 2, 1, 3).reshape(B, S, N * H)
        x3 = a @ wo + bo[0] + x
        x4 = ln(x3, g2, b2)
        up = jax.nn.gelu(x4 @ wup + bup[0], approximate=False)
        x = up @ wdn + bdn[0] + x3
    xn = ln(x, params["ln_g"], params["ln_b"])
    return xn[:, -1:, :] @ params["tok_emb"].T + params["lm_bias"][0]


# ------------------------------------------------------------------------ main
if __name__ == "__main__":
    cfg = dict(n_block=2, seq_len=8, embed=32, hidden=16, n_head=2,
               expansion=2, vocab=64)
    key = jax.random.PRNGKey(0)
    params = init_params(key, cfg)
    kparams = prepare_kernel_params(params, cfg)

    B = 2
    inputs = jax.random.randint(jax.random.fold_in(key, 999),
                                (B, cfg["seq_len"]), 0, cfg["vocab"], dtype=jnp.int32)

    logits, loss = toygpt_forward(inputs, kparams, cfg)
    logits = jax.block_until_ready(logits)

    assert logits.shape == (B, 1, cfg["vocab"]) and loss is None
    ref = _reference_forward(inputs, params, cfg)
    # bf16 MXU operands (f32 accumulation) -> slightly looser tolerance vs f32 reference.
    assert jnp.allclose(logits, ref, atol=2e-2, rtol=2e-2), "mismatch vs reference"

    print("KERNEL_OK")
</pallas_src>

<mosaic_0001>
module attributes {stable_mosaic.version = 11 : i64} {
  func.func @gpt_blocks_kernel(%arg0: i32, %arg1: i32, %arg2: memref<1x8x32xf32, #tpu.memory_space<vmem>>, %arg3: memref<1x1x32xf32, #tpu.memory_space<vmem>>, %arg4: memref<1x1x32xf32, #tpu.memory_space<vmem>>, %arg5: memref<1x32x96xbf16, #tpu.memory_space<vmem>>, %arg6: memref<1x1x96xf32, #tpu.memory_space<vmem>>, %arg7: memref<1x32x32xbf16, #tpu.memory_space<vmem>>, %arg8: memref<1x1x32xf32, #tpu.memory_space<vmem>>, %arg9: memref<1x1x32xf32, #tpu.memory_space<vmem>>, %arg10: memref<1x1x32xf32, #tpu.memory_space<vmem>>, %arg11: memref<1x32x64xbf16, #tpu.memory_space<vmem>>, %arg12: memref<1x1x64xf32, #tpu.memory_space<vmem>>, %arg13: memref<1x64x32xbf16, #tpu.memory_space<vmem>>, %arg14: memref<1x1x32xf32, #tpu.memory_space<vmem>>, %arg15: memref<1x32xf32, #tpu.memory_space<vmem>>, %arg16: memref<1x32xf32, #tpu.memory_space<vmem>>, %arg17: memref<1x1x32xf32, #tpu.memory_space<vmem>>, %arg18: memref<8x32xf32, #tpu.memory_space<vmem>>) attributes {dimension_semantics = [#tpu.dimension_semantics<parallel>, #tpu.dimension_semantics<arbitrary>], iteration_bounds = array<i64: 2, 2>, scalar_prefetch = 0 : i64, scratch_operands = 1 : i64, tpu.core_type = #tpu.core_type<tc>, window_params = [{transform_indices = @transform_0, window_bounds = array<i64: 1, 8, 32>}, {transform_indices = @transform_1, window_bounds = array<i64: 1, 1, 32>}, {transform_indices = @transform_2, window_bounds = array<i64: 1, 1, 32>}, {transform_indices = @transform_3, window_bounds = array<i64: 1, 32, 96>}, {transform_indices = @transform_4, window_bounds = array<i64: 1, 1, 96>}, {transform_indices = @transform_5, window_bounds = array<i64: 1, 32, 32>}, {transform_indices = @transform_6, window_bounds = array<i64: 1, 1, 32>}, {transform_indices = @transform_7, window_bounds = array<i64: 1, 1, 32>}, {transform_indices = @transform_8, window_bounds = array<i64: 1, 1, 32>}, {transform_indices = @transform_9, window_bounds = array<i64: 1, 32, 64>}, {transform_indices = @transform_10, window_bounds = array<i64: 1, 1, 64>}, {transform_indices = @transform_11, window_bounds = array<i64: 1, 64, 32>}, {transform_indices = @transform_12, window_bounds = array<i64: 1, 1, 32>}, {pipeline_mode = #tpu.pipeline_mode<synchronous>, transform_indices = @transform_13, window_bounds = array<i64: 1, 32>}, {pipeline_mode = #tpu.pipeline_mode<synchronous>, transform_indices = @transform_14, window_bounds = array<i64: 1, 32>}, {transform_indices = @transform_15, window_bounds = array<i64: 1, 1, 32>}]} {
    %c0_i32 = arith.constant 0 : i32
    %0 = arith.cmpi eq, %arg1, %c0_i32 : i32
    %1 = arith.extui %0 : i1 to i32
    %c0_i32_0 = arith.constant 0 : i32
    %2 = arith.cmpi ne, %1, %c0_i32_0 : i32
    scf.if %2 {
      %c0_75 = arith.constant 0 : index
      %c0_76 = arith.constant 0 : index
      %c0_77 = arith.constant 0 : index
      %167 = vector.load %arg2[%c0_75, %c0_76, %c0_77] : memref<1x8x32xf32, #tpu.memory_space<vmem>>, vector<1x8x32xf32>
      %168 = vector.shape_cast %167 : vector<1x8x32xf32> to vector<8x32xf32>
      %c0_78 = arith.constant 0 : index
      %c0_79 = arith.constant 0 : index
      %169 = vector.load %arg18[%c0_78, %c0_79] : memref<8x32xf32, #tpu.memory_space<vmem>>, vector<8x32xf32>
      tpu.vector_store %arg18[%c0_78, %c0_79], %168 {strides = array<i32>} : memref<8x32xf32, #tpu.memory_space<vmem>>, vector<8x32xf32>,
    } else {
    }
    %c0 = arith.constant 0 : index
    %c0_1 = arith.constant 0 : index
    %3 = vector.load %arg18[%c0, %c0_1] : memref<8x32xf32, #tpu.memory_space<vmem>>, vector<8x32xf32>
    %c0_2 = arith.constant 0 : index
    %c0_3 = arith.constant 0 : index
    %c0_4 = arith.constant 0 : index
    %4 = vector.load %arg3[%c0_2, %c0_3, %c0_4] : memref<1x1x32xf32, #tpu.memory_space<vmem>>, vector<1x1x32xf32>
    %5 = vector.shape_cast %4 : vector<1x1x32xf32> to vector<1x32xf32>
    %c0_5 = arith.constant 0 : index
    %c0_6 = arith.constant 0 : index
    %c0_7 = arith.constant 0 : index
    %6 = vector.load %arg4[%c0_5, %c0_6, %c0_7] : memref<1x1x32xf32, #tpu.memory_space<vmem>>, vector<1x1x32xf32>
    %7 = vector.shape_cast %6 : vector<1x1x32xf32> to vector<1x32xf32>
    %cst = arith.constant dense<0.000000e+00> : vector<8xf32>
    %8 = vector.multi_reduction <add>, %3, %cst [1] : vector<8x32xf32> to vector<8xf32>
    %9 = vector.shape_cast %8 : vector<8xf32> to vector<8x1xf32>
    %cst_8 = arith.constant 3.200000e+01 : f32
    %10 = vector.broadcast %cst_8 : f32 to vector<8x1xf32>
    %11 = arith.divf %9, %10 : vector<8x1xf32>
    %12 = vector.broadcast %11 : vector<8x1xf32> to vector<8x32xf32>
    %13 = arith.subf %3, %12 : vector<8x32xf32>
    %14 = arith.mulf %13, %13 : vector<8x32xf32>
    %cst_9 = arith.constant dense<0.000000e+00> : vector<8xf32>
    %15 = vector.multi_reduction <add>, %14, %cst_9 [1] : vector<8x32xf32> to vector<8xf32>
    %16 = vector.shape_cast %15 : vector<8xf32> to vector<8x1xf32>
    %cst_10 = arith.constant 3.200000e+01 : f32
    %17 = vector.broadcast %cst_10 : f32 to vector<8x1xf32>
    %18 = arith.divf %16, %17 : vector<8x1xf32>
    %cst_11 = arith.constant 9.99999974E-6 : f32
    %19 = vector.broadcast %cst_11 : f32 to vector<8x1xf32>
    %20 = arith.addf %18, %19 : vector<8x1xf32>
    %21 = math.rsqrt %20 : vector<8x1xf32>
    %22 = vector.broadcast %21 : vector<8x1xf32> to vector<8x32xf32>
    %23 = arith.mulf %13, %22 : vector<8x32xf32>
    %24 = vector.broadcast %5 : vector<1x32xf32> to vector<8x32xf32>
    %25 = arith.mulf %23, %24 : vector<8x32xf32>
    %26 = vector.broadcast %7 : vector<1x32xf32> to vector<8x32xf32>
    %27 = arith.addf %25, %26 : vector<8x32xf32>
    %28 = arith.truncf %27 : vector<8x32xf32> to vector<8x32xbf16>
    %c0_12 = arith.constant 0 : index
    %c0_13 = arith.constant 0 : index
    %c0_14 = arith.constant 0 : index
    %29 = vector.load %arg5[%c0_12, %c0_13, %c0_14] : memref<1x32x96xbf16, #tpu.memory_space<vmem>>, vector<1x32x96xbf16>
    %30 = vector.shape_cast %29 : vector<1x32x96xbf16> to vector<32x96xbf16>
    %cst_15 = arith.constant dense<0.000000e+00> : vector<8x96xf32>
    %31 = tpu.matmul %28, %30, %cst_15 {dimension_numbers = #tpu.dot_dimension_numbers<[1], [0], [0], [1], [0, 0, 1, 1], [], []>} : vector<8x32xbf16>, vector<32x96xbf16>, vector<8x96xf32> -> vector<8x96xf32>
    %c0_16 = arith.constant 0 : index
    %c0_17 = arith.constant 0 : index
    %c0_18 = arith.constant 0 : index
    %32 = vector.load %arg6[%c0_16, %c0_17, %c0_18] : memref<1x1x96xf32, #tpu.memory_space<vmem>>, vector<1x1x96xf32>
    %33 = vector.shape_cast %32 : vector<1x1x96xf32> to vector<1x96xf32>
    %34 = vector.broadcast %33 : vector<1x96xf32> to vector<8x96xf32>
    %35 = arith.addf %31, %34 : vector<8x96xf32>
    %36 = vector.extract_strided_slice %35 {offsets = [0, 0], sizes = [8, 32], strides = [1, 1]} : vector<8x96xf32> to vector<8x32xf32>
    %37 = vector.shape_cast %36 : vector<8x32xf32> to vector<8x2x16xf32>
    %38 = tpu.transpose %37, [1, 0, 2] : vector<8x2x16xf32> -> vector<2x8x16xf32>
    %39 = arith.truncf %38 : vector<2x8x16xf32> to vector<2x8x16xbf16>
    %40 = vector.extract_strided_slice %35 {offsets = [0, 32], sizes = [8, 32], strides = [1, 1]} : vector<8x96xf32> to vector<8x32xf32>
    %41 = vector.shape_cast %40 : vector<8x32xf32> to vector<8x2x16xf32>
    %42 = tpu.transpose %41, [1, 0, 2] : vector<8x2x16xf32> -> vector<2x8x16xf32>
    %43 = arith.truncf %42 : vector<2x8x16xf32> to vector<2x8x16xbf16>
    %44 = vector.extract_strided_slice %35 {offsets = [0, 64], sizes = [8, 32], strides = [1, 1]} : vector<8x96xf32> to vector<8x32xf32>
    %45 = vector.shape_cast %44 : vector<8x32xf32> to vector<8x2x16xf32>
    %46 = tpu.transpose %45, [1, 0, 2] : vector<8x2x16xf32> -> vector<2x8x16xf32>
    %47 = arith.truncf %46 : vector<2x8x16xf32> to vector<2x8x16xbf16>
    "tpu.trace_start"() <{level = 10 : i32, message = "nqh,nkh->nqk"}> : () -> ()
    %cst_19 = arith.constant dense<0.000000e+00> : vector<2x8x8xf32>
    %48 = tpu.matmul %39, %43, %cst_19 {dimension_numbers = #tpu.dot_dimension_numbers<[2], [2], [1], [1], [0, 0, 0, 1, 1, 1], [0], [0]>} : vector<2x8x16xbf16>, vector<2x8x16xbf16>, vector<2x8x8xf32> -> vector<2x8x8xf32>
    "tpu.trace_stop"() : () -> ()
    %cst_20 = arith.constant 2.500000e-01 : f32
    %49 = vector.broadcast %cst_20 : f32 to vector<2x8x8xf32>
    %50 = arith.mulf %48, %49 : vector<2x8x8xf32>
    %51 = tpu.iota {dimensions = array<i32: 0>} : vector<8x8xi32>
    %52 = tpu.iota {dimensions = array<i32: 1>} : vector<8x8xi32>
    %53 = arith.cmpi sge, %51, %52 : vector<8x8xi32>
    %54 = vector.shape_cast %53 : vector<8x8xi1> to vector<1x8x8xi1>
    %cst_21 = arith.constant -1.000000e+30 : f32
    %55 = vector.shape_cast %54 : vector<1x8x8xi1> to vector<1x8x8xi1>
    %56 = vector.broadcast %55 : vector<1x8x8xi1> to vector<2x8x8xi1>
    %57 = vector.broadcast %cst_21 : f32 to vector<2x8x8xf32>
    %58 = arith.select %56, %50, %57 : vector<2x8x8xi1>, vector<2x8x8xf32>
    %cst_22 = arith.constant dense<0xFF800000> : vector<2x8xf32>
    %59 = vector.multi_reduction <maximumf>, %58, %cst_22 [2] : vector<2x8x8xf32> to vector<2x8xf32>
    %60 = vector.shape_cast %59 : vector<2x8xf32> to vector<2x8x1xf32>
    %61 = vector.broadcast %60 : vector<2x8x1xf32> to vector<2x8x8xf32>
    %62 = arith.subf %58, %61 : vector<2x8x8xf32>
    %63 = math.exp %62 : vector<2x8x8xf32>
    %cst_23 = arith.constant dense<0.000000e+00> : vector<2x8xf32>
    %64 = vector.multi_reduction <add>, %63, %cst_23 [2] : vector<2x8x8xf32> to vector<2x8xf32>
    %65 = vector.shape_cast %64 : vector<2x8xf32> to vector<2x8x1xf32>
    %66 = tpu.reciprocal %65 {approx = true} : vector<2x8x1xf32> -> vector<2x8x1xf32>
    %67 = vector.broadcast %66 : vector<2x8x1xf32> to vector<2x8x8xf32>
    %68 = arith.mulf %63, %67 : vector<2x8x8xf32>
    %69 = arith.truncf %68 : vector<2x8x8xf32> to vector<2x8x8xbf16>
    "tpu.trace_start"() <{level = 10 : i32, message = "nqk,nkh->qnh"}> : () -> ()
    %cst_24 = arith.constant dense<0.000000e+00> : vector<2x16x8xf32>
    %70 = tpu.matmul %47, %69, %cst_24 {dimension_numbers = #tpu.dot_dimension_numbers<[1], [2], [2], [1], [0, 0, 0, 2, 1, 1], [0], [0]>} : vector<2x8x16xbf16>, vector<2x8x8xbf16>, vector<2x16x8xf32> -> vector<2x16x8xf32>
    %71 = tpu.transpose %70, [2, 0, 1] : vector<2x16x8xf32> -> vector<8x2x16xf32>
    "tpu.trace_stop"() : () -> ()
    %72 = vector.shape_cast %71 : vector<8x2x16xf32> to vector<8x32xf32>
    %73 = arith.truncf %72 : vector<8x32xf32> to vector<8x32xbf16>
    %c0_25 = arith.constant 0 : index
    %c0_26 = arith.constant 0 : index
    %c0_27 = arith.constant 0 : index
    %74 = vector.load %arg7[%c0_25, %c0_26, %c0_27] : memref<1x32x32xbf16, #tpu.memory_space<vmem>>, vector<1x32x32xbf16>
    %75 = vector.shape_cast %74 : vector<1x32x32xbf16> to vector<32x32xbf16>
    %cst_28 = arith.constant dense<0.000000e+00> : vector<8x32xf32>
    %76 = tpu.matmul %73, %75, %cst_28 {dimension_numbers = #tpu.dot_dimension_numbers<[1], [0], [0], [1], [0, 0, 1, 1], [], []>} : vector<8x32xbf16>, vector<32x32xbf16>, vector<8x32xf32> -> vector<8x32xf32>
    %c0_29 = arith.constant 0 : index
    %c0_30 = arith.constant 0 : index
    %c0_31 = arith.constant 0 : index
    %77 = vector.load %arg8[%c0_29, %c0_30, %c0_31] : memref<1x1x32xf32, #tpu.memory_space<vmem>>, vector<1x1x32xf32>
    %78 = vector.shape_cast %77 : vector<1x1x32xf32> to vector<1x32xf32>
    %79 = vector.broadcast %78 : vector<1x32xf32> to vector<8x32xf32>
    %80 = arith.addf %76, %79 : vector<8x32xf32>
    %81 = arith.addf %80, %3 : vector<8x32xf32>
    %c0_32 = arith.constant 0 : index
    %c0_33 = arith.constant 0 : index
    %c0_34 = arith.constant 0 : index
    %82 = vector.load %arg9[%c0_32, %c0_33, %c0_34] : memref<1x1x32xf32, #tpu.memory_space<vmem>>, vector<1x1x32xf32>
    %83 = vector.shape_cast %82 : vector<1x1x32xf32> to vector<1x32xf32>
    %c0_35 = arith.constant 0 : index
    %c0_36 = arith.constant 0 : index
    %c0_37 = arith.constant 0 : index
    %84 = vector.load %arg10[%c0_35, %c0_36, %c0_37] : memref<1x1x32xf32, #tpu.memory_space<vmem>>, vector<1x1x32xf32>
    %85 = vector.shape_cast %84 : vector<1x1x32xf32> to vector<1x32xf32>
    %cst_38 = arith.constant dense<0.000000e+00> : vector<8xf32>
    %86 = vector.multi_reduction <add>, %81, %cst_38 [1] : vector<8x32xf32> to vector<8xf32>
    %87 = vector.shape_cast %86 : vector<8xf32> to vector<8x1xf32>
    %cst_39 = arith.constant 3.200000e+01 : f32
    %88 = vector.broadcast %cst_39 : f32 to vector<8x1xf32>
    %89 = arith.divf %87, %88 : vector<8x1xf32>
    %90 = vector.broadcast %89 : vector<8x1xf32> to vector<8x32xf32>
    %91 = arith.subf %81, %90 : vector<8x32xf32>
    %92 = arith.mulf %91, %91 : vector<8x32xf32>
    %cst_40 = arith.constant dense<0.000000e+00> : vector<8xf32>
    %93 = vector.multi_reduction <add>, %92, %cst_40 [1] : vector<8x32xf32> to vector<8xf32>
    %94 = vector.shape_cast %93 : vector<8xf32> to vector<8x1xf32>
    %cst_41 = arith.constant 3.200000e+01 : f32
    %95 = vector.broadcast %cst_41 : f32 to vector<8x1xf32>
    %96 = arith.divf %94, %95 : vector<8x1xf32>
    %cst_42 = arith.constant 9.99999974E-6 : f32
    %97 = vector.broadcast %cst_42 : f32 to vector<8x1xf32>
    %98 = arith.addf %96, %97 : vector<8x1xf32>
    %99 = math.rsqrt %98 : vector<8x1xf32>
    %100 = vector.broadcast %99 : vector<8x1xf32> to vector<8x32xf32>
    %101 = arith.mulf %91, %100 : vector<8x32xf32>
    %102 = vector.broadcast %83 : vector<1x32xf32> to vector<8x32xf32>
    %103 = arith.mulf %101, %102 : vector<8x32xf32>
    %104 = vector.broadcast %85 : vector<1x32xf32> to vector<8x32xf32>
    %105 = arith.addf %103, %104 : vector<8x32xf32>
    %106 = arith.truncf %105 : vector<8x32xf32> to vector<8x32xbf16>
    %c0_43 = arith.constant 0 : index
    %c0_44 = arith.constant 0 : index
    %c0_45 = arith.constant 0 : index
    %107 = vector.load %arg11[%c0_43, %c0_44, %c0_45] : memref<1x32x64xbf16, #tpu.memory_space<vmem>>, vector<1x32x64xbf16>
    %108 = vector.shape_cast %107 : vector<1x32x64xbf16> to vector<32x64xbf16>
    %cst_46 = arith.constant dense<0.000000e+00> : vector<8x64xf32>
    %109 = tpu.matmul %106, %108, %cst_46 {dimension_numbers = #tpu.dot_dimension_numbers<[1], [0], [0], [1], [0, 0, 1, 1], [], []>} : vector<8x32xbf16>, vector<32x64xbf16>, vector<8x64xf32> -> vector<8x64xf32>
    %c0_47 = arith.constant 0 : index
    %c0_48 = arith.constant 0 : index
    %c0_49 = arith.constant 0 : index
    %110 = vector.load %arg12[%c0_47, %c0_48, %c0_49] : memref<1x1x64xf32, #tpu.memory_space<vmem>>, vector<1x1x64xf32>
    %111 = vector.shape_cast %110 : vector<1x1x64xf32> to vector<1x64xf32>
    %112 = vector.broadcast %111 : vector<1x64xf32> to vector<8x64xf32>
    %113 = arith.addf %109, %112 : vector<8x64xf32>
    %cst_50 = arith.constant 5.000000e-01 : f32
    %114 = vector.broadcast %cst_50 : f32 to vector<8x64xf32>
    %115 = arith.mulf %114, %113 : vector<8x64xf32>
    %cst_51 = arith.constant 0.707106769 : f32
    %116 = vector.broadcast %cst_51 : f32 to vector<8x64xf32>
    %117 = arith.mulf %113, %116 : vector<8x64xf32>
    %cst_52 = arith.constant 0.000000e+00 : f32
    %118 = vector.broadcast %cst_52 : f32 to vector<8x64xf32>
    %119 = arith.cmpf oge, %117, %118 : vector<8x64xf32>
    %cst_53 = arith.constant 1.000000e+00 : f32
    %cst_54 = arith.constant -1.000000e+00 : f32
    %120 = vector.broadcast %cst_53 : f32 to vector<8x64xf32>
    %121 = vector.broadcast %cst_54 : f32 to vector<8x64xf32>
    %122 = arith.select %119, %120, %121 : vector<8x64xi1>, vector<8x64xf32>
    %123 = math.absf %117 : vector<8x64xf32>
    %cst_55 = arith.constant 0.327591091 : f32
    %124 = vector.broadcast %cst_55 : f32 to vector<8x64xf32>
    %125 = arith.mulf %124, %123 : vector<8x64xf32>
    %cst_56 = arith.constant 1.000000e+00 : f32
    %126 = vector.broadcast %cst_56 : f32 to vector<8x64xf32>
    %127 = arith.addf %126, %125 : vector<8x64xf32>
    %128 = tpu.reciprocal %127 {approx = true} : vector<8x64xf32> -> vector<8x64xf32>
    %cst_57 = arith.constant 1.06140542 : f32
    %129 = vector.broadcast %cst_57 : f32 to vector<8x64xf32>
    %130 = arith.mulf %129, %128 : vector<8x64xf32>
    %cst_58 = arith.constant -1.45315206 : f32
    %131 = vector.broadcast %cst_58 : f32 to vector<8x64xf32>
    %132 = arith.addf %130, %131 : vector<8x64xf32>
    %133 = arith.mulf %132, %128 : vector<8x64xf32>
    %cst_59 = arith.constant 1.42141378 : f32
    %134 = vector.broadcast %cst_59 : f32 to vector<8x64xf32>
    %135 = arith.addf %133, %134 : vector<8x64xf32>
    %136 = arith.mulf %135, %128 : vector<8x64xf32>
    %cst_60 = arith.constant -0.284496725 : f32
    %137 = vector.broadcast %cst_60 : f32 to vector<8x64xf32>
    %138 = arith.addf %136, %137 : vector<8x64xf32>
    %139 = arith.mulf %138, %128 : vector<8x64xf32>
    %cst_61 = arith.constant 0.254829586 : f32
    %140 = vector.broadcast %cst_61 : f32 to vector<8x64xf32>
    %141 = arith.addf %139, %140 : vector<8x64xf32>
    %142 = arith.mulf %141, %128 : vector<8x64xf32>
    %cst_62 = arith.constant 0.000000e+00 : f32
    %143 = vector.broadcast %cst_62 : f32 to vector<8x64xf32>
    %144 = arith.subf %143, %123 : vector<8x64xf32>
    %145 = arith.mulf %144, %123 : vector<8x64xf32>
    %146 = math.exp %145 : vector<8x64xf32>
    %147 = arith.mulf %142, %146 : vector<8x64xf32>
    %cst_63 = arith.constant 1.000000e+00 : f32
    %148 = vector.broadcast %cst_63 : f32 to vector<8x64xf32>
    %149 = arith.subf %148, %147 : vector<8x64xf32>
    %150 = arith.mulf %122, %149 : vector<8x64xf32>
    %cst_64 = arith.constant 1.000000e+00 : f32
    %151 = vector.broadcast %cst_64 : f32 to vector<8x64xf32>
    %152 = arith.addf %151, %150 : vector<8x64xf32>
    %153 = arith.mulf %115, %152 : vector<8x64xf32>
    %154 = arith.truncf %153 : vector<8x64xf32> to vector<8x64xbf16>
    %c0_65 = arith.constant 0 : index
    %c0_66 = arith.constant 0 : index
    %c0_67 = arith.constant 0 : index
    %155 = vector.load %arg13[%c0_65, %c0_66, %c0_67] : memref<1x64x32xbf16, #tpu.memory_space<vmem>>, vector<1x64x32xbf16>
    %156 = vector.shape_cast %155 : vector<1x64x32xbf16> to vector<64x32xbf16>
    %cst_68 = arith.constant dense<0.000000e+00> : vector<8x32xf32>
    %157 = tpu.matmul %154, %156, %cst_68 {dimension_numbers = #tpu.dot_dimension_numbers<[1], [0], [0], [1], [0, 0, 1, 1], [], []>} : vector<8x64xbf16>, vector<64x32xbf16>, vector<8x32xf32> -> vector<8x32xf32>
    %c0_69 = arith.constant 0 : index
    %c0_70 = arith.constant 0 : index
    %c0_71 = arith.constant 0 : index
    %158 = vector.load %arg14[%c0_69, %c0_70, %c0_71] : memref<1x1x32xf32, #tpu.memory_space<vmem>>, vector<1x1x32xf32>
    %159 = vector.shape_cast %158 : vector<1x1x32xf32> to vector<1x32xf32>
    %160 = vector.broadcast %159 : vector<1x32xf32> to vector<8x32xf32>
    %161 = arith.addf %157, %160 : vector<8x32xf32>
    %162 = arith.addf %161, %81 : vector<8x32xf32>
    %c0_72 = arith.constant 0 : index
    %c0_73 = arith.constant 0 : index
    %163 = vector.load %arg18[%c0_72, %c0_73] : memref<8x32xf32, #tpu.memory_space<vmem>>, vector<8x32xf32>
    tpu.vector_store %arg18[%c0_72, %c0_73], %162 {strides = array<i32>} : memref<8x32xf32, #tpu.memory_space<vmem>>, vector<8x32xf32>,
    %c1_i32 = arith.constant 1 : i32
    %164 = arith.cmpi eq, %arg1, %c1_i32 : i32
    %165 = arith.extui %164 : i1 to i32
    %c0_i32_74 = arith.constant 0 : i32
    %166 = arith.cmpi ne, %165, %c0_i32_74 : i32
    scf.if %166 {
      %167 = vector.extract_strided_slice %162 {offsets = [7, 0], sizes = [1, 32], strides = [1, 1]} : vector<8x32xf32> to vector<1x32xf32>
      %c0_75 = arith.constant 0 : index
      %c0_76 = arith.constant 0 : index
      %168 = vector.load %arg15[%c0_75, %c0_76] : memref<1x32xf32, #tpu.memory_space<vmem>>, vector<1x32xf32>
      %c0_77 = arith.constant 0 : index
      %c0_78 = arith.constant 0 : index
      %169 = vector.load %arg16[%c0_77, %c0_78] : memref<1x32xf32, #tpu.memory_space<vmem>>, vector<1x32xf32>
      %cst_79 = arith.constant dense<0.000000e+00> : vector<1xf32>
      %170 = vector.multi_reduction <add>, %167, %cst_79 [1] : vector<1x32xf32> to vector<1xf32>
      %171 = vector.shape_cast %170 : vector<1xf32> to vector<1x1xf32>
      %cst_80 = arith.constant 3.200000e+01 : f32
      %172 = vector.broadcast %cst_80 : f32 to vector<1x1xf32>
      %173 = arith.divf %171, %172 : vector<1x1xf32>
      %174 = vector.broadcast %173 : vector<1x1xf32> to vector<1x32xf32>
      %175 = arith.subf %167, %174 : vector<1x32xf32>
      %176 = arith.mulf %175, %175 : vector<1x32xf32>
      %cst_81 = arith.constant dense<0.000000e+00> : vector<1xf32>
      %177 = vector.multi_reduction <add>, %176, %cst_81 [1] : vector<1x32xf32> to vector<1xf32>
      %178 = vector.shape_cast %177 : vector<1xf32> to vector<1x1xf32>
      %cst_82 = arith.constant 3.200000e+01 : f32
      %179 = vector.broadcast %cst_82 : f32 to vector<1x1xf32>
      %180 = arith.divf %178, %179 : vector<1x1xf32>
      %cst_83 = arith.constant 9.99999974E-6 : f32
      %181 = vector.broadcast %cst_83 : f32 to vector<1x1xf32>
      %182 = arith.addf %180, %181 : vector<1x1xf32>
      %183 = math.rsqrt %182 : vector<1x1xf32>
      %184 = vector.broadcast %183 : vector<1x1xf32> to vector<1x32xf32>
      %185 = arith.mulf %175, %184 : vector<1x32xf32>
      %186 = arith.mulf %185, %168 : vector<1x32xf32>
      %187 = arith.addf %186, %169 : vector<1x32xf32>
      %c0_84 = arith.constant 0 : index
      %c0_85 = arith.constant 0 : index
      %c0_86 = arith.constant 0 : index
      %188 = vector.load %arg17[%c0_84, %c0_85, %c0_86] : memref<1x1x32xf32, #tpu.memory_space<vmem>>, vector<1x1x32xf32>
      %189 = vector.shape_cast %188 : vector<1x1x32xf32> to vector<1x32xf32>
      %190 = vector.shape_cast %187 : vector<1x32xf32> to vector<1x1x32xf32>
      tpu.vector_store %arg17[%c0_84, %c0_85, %c0_86], %190 {strides = array<i32>} : memref<1x1x32xf32, #tpu.memory_space<vmem>>, vector<1x1x32xf32>,
    } else {
    }
    return
  }
  func.func @transform_0(%arg0: i32, %arg1: i32) -> (i32, i32, i32) {
    %c0_i32 = arith.constant 0 : i32
    %c0_i32_0 = arith.constant 0 : i32
    %c0_i32_1 = arith.constant 0 : i32
    return %arg0, %c0_i32, %c0_i32_0 : i32, i32, i32
  }
  func.func @transform_1(%arg0: i32, %arg1: i32) -> (i32, i32, i32) {
    %c0_i32 = arith.constant 0 : i32
    %c0_i32_0 = arith.constant 0 : i32
    %c0_i32_1 = arith.constant 0 : i32
    return %arg1, %c0_i32, %c0_i32_0 : i32, i32, i32
  }
  func.func @transform_2(%arg0: i32, %arg1: i32) -> (i32, i32, i32) {
    %c0_i32 = arith.constant 0 : i32
    %c0_i32_0 = arith.constant 0 : i32
    %c0_i32_1 = arith.constant 0 : i32
    return %arg1, %c0_i32, %c0_i32_0 : i32, i32, i32
  }
  func.func @transform_3(%arg0: i32, %arg1: i32) -> (i32, i32, i32) {
    %c0_i32 = arith.constant 0 : i32
    %c0_i32_0 = arith.constant 0 : i32
    %c0_i32_1 = arith.constant 0 : i32
    return %arg1, %c0_i32, %c0_i32_0 : i32, i32, i32
  }
  func.func @transform_4(%arg0: i32, %arg1: i32) -> (i32, i32, i32) {
    %c0_i32 = arith.constant 0 : i32
    %c0_i32_0 = arith.constant 0 : i32
    %c0_i32_1 = arith.constant 0 : i32
    return %arg1, %c0_i32, %c0_i32_0 : i32, i32, i32
  }
  func.func @transform_5(%arg0: i32, %arg1: i32) -> (i32, i32, i32) {
    %c0_i32 = arith.constant 0 : i32
    %c0_i32_0 = arith.constant 0 : i32
    %c0_i32_1 = arith.constant 0 : i32
    return %arg1, %c0_i32, %c0_i32_0 : i32, i32, i32
  }
  func.func @transform_6(%arg0: i32, %arg1: i32) -> (i32, i32, i32) {
    %c0_i32 = arith.constant 0 : i32
    %c0_i32_0 = arith.constant 0 : i32
    %c0_i32_1 = arith.constant 0 : i32
    return %arg1, %c0_i32, %c0_i32_0 : i32, i32, i32
  }
  func.func @transform_7(%arg0: i32, %arg1: i32) -> (i32, i32, i32) {
    %c0_i32 = arith.constant 0 : i32
    %c0_i32_0 = arith.constant 0 : i32
    %c0_i32_1 = arith.constant 0 : i32
    return %arg1, %c0_i32, %c0_i32_0 : i32, i32, i32
  }
  func.func @transform_8(%arg0: i32, %arg1: i32) -> (i32, i32, i32) {
    %c0_i32 = arith.constant 0 : i32
    %c0_i32_0 = arith.constant 0 : i32
    %c0_i32_1 = arith.constant 0 : i32
    return %arg1, %c0_i32, %c0_i32_0 : i32, i32, i32
  }
  func.func @transform_9(%arg0: i32, %arg1: i32) -> (i32, i32, i32) {
    %c0_i32 = arith.constant 0 : i32
    %c0_i32_0 = arith.constant 0 : i32
    %c0_i32_1 = arith.constant 0 : i32
    return %arg1, %c0_i32, %c0_i32_0 : i32, i32, i32
  }
  func.func @transform_10(%arg0: i32, %arg1: i32) -> (i32, i32, i32) {
    %c0_i32 = arith.constant 0 : i32
    %c0_i32_0 = arith.constant 0 : i32
    %c0_i32_1 = arith.constant 0 : i32
    return %arg1, %c0_i32, %c0_i32_0 : i32, i32, i32
  }
  func.func @transform_11(%arg0: i32, %arg1: i32) -> (i32, i32, i32) {
    %c0_i32 = arith.constant 0 : i32
    %c0_i32_0 = arith.constant 0 : i32
    %c0_i32_1 = arith.constant 0 : i32
    return %arg1, %c0_i32, %c0_i32_0 : i32, i32, i32
  }
  func.func @transform_12(%arg0: i32, %arg1: i32) -> (i32, i32, i32) {
    %c0_i32 = arith.constant 0 : i32
    %c0_i32_0 = arith.constant 0 : i32
    %c0_i32_1 = arith.constant 0 : i32
    return %arg1, %c0_i32, %c0_i32_0 : i32, i32, i32
  }
  func.func @transform_13(%arg0: i32, %arg1: i32) -> (i32, i32) {
    %c0_i32 = arith.constant 0 : i32
    %c0_i32_0 = arith.constant 0 : i32
    %c0_i32_1 = arith.constant 0 : i32
    return %c0_i32, %c0_i32_0 : i32, i32
  }
  func.func @transform_14(%arg0: i32, %arg1: i32) -> (i32, i32) {
    %c0_i32 = arith.constant 0 : i32
    %c0_i32_0 = arith.constant 0 : i32
    %c0_i32_1 = arith.constant 0 : i32
    return %c0_i32, %c0_i32_0 : i32, i32
  }
  func.func @transform_15(%arg0: i32, %arg1: i32) -> (i32, i32, i32) {
    %c0_i32 = arith.constant 0 : i32
    %c0_i32_0 = arith.constant 0 : i32
    %c0_i32_1 = arith.constant 0 : i32
    return %arg0, %c0_i32, %c0_i32_0 : i32, i32, i32
  }
}

</mosaic_0001>

<llo_original>
// kernel: tpu_custom_call.1
$region0: #{tpu_custom_call.1}
  #allocation0 [shape = 'u32[]', space=smem, size = 0x4, offset = 0x4, fixed_abs, tag = 'smem constant byte address 0x4 - core index']
  #allocation1 [shape = 'u32[144,128]{1,0:T(1,128)}', space=vmem, size = 0x12000, scoped, tag = 'internal scratch']
  #allocation2 [shape = 'f32[8,32]{1,0:T(8,128)}', space=vmem, size = 0x1000, scoped, tag = 'scratch operand']
  %s0 = inlined_call_operand.hbm [shape: f32[2,8,32], index: 0, kind: input, shape index: {}]
  %s1 = inlined_call_operand.vmem [shape: f32[2,1,32], index: 1, kind: input, shape index: {}]
  %s2 = inlined_call_operand.vmem [shape: f32[2,1,32], index: 2, kind: input, shape index: {}]
  %s3 = inlined_call_operand.vmem [shape: bf16[2,32,96], index: 3, kind: input, shape index: {}]
  %s4 = inlined_call_operand.vmem [shape: f32[2,1,96], index: 4, kind: input, shape index: {}]
  %s5 = inlined_call_operand.vmem [shape: bf16[2,32,32], index: 5, kind: input, shape index: {}]
  %s6 = inlined_call_operand.vmem [shape: f32[2,1,32], index: 6, kind: input, shape index: {}]
  %s7 = inlined_call_operand.hbm [shape: f32[2,1,32], index: 7, kind: input, shape index: {}]
  %s8 = inlined_call_operand.hbm [shape: f32[2,1,32], index: 8, kind: input, shape index: {}]
  %s9 = inlined_call_operand.vmem [shape: bf16[2,32,64], index: 9, kind: input, shape index: {}]
  %s10 = inlined_call_operand.hbm [shape: f32[2,1,64], index: 10, kind: input, shape index: {}]
  %s11 = inlined_call_operand.vmem [shape: bf16[2,64,32], index: 11, kind: input, shape index: {}]
  %s12 = inlined_call_operand.vmem [shape: f32[2,1,32], index: 12, kind: input, shape index: {}]
  %s13 = inlined_call_operand.vmem [shape: f32[1,32], index: 13, kind: input, shape index: {}]
  %s14 = inlined_call_operand.vmem [shape: f32[1,32], index: 14, kind: input, shape index: {}]
  %s15 = inlined_call_operand.hbm [shape: f32[2,1,32], index: 15, kind: output, shape index: {}]
  %s16 = sld [smem:[#allocation0]]
  $region117: #{tpu_custom_call.1} parent=0
    _
  %s18 = ssub.s32 1, %s16
  %s19 = scalar_select 0, %s18, %s16
  $region1: #{tpu_custom_call.1} parent=0
    #allocation3 [shape = 'u8[8192]{0}', space=vmem, size = 0x2000, scoped, tag = 'input window, operand 0']
    #allocation4 [shape = 's32[2]{0}', space=sflag, size = 0x8, scoped, tag = 'scoped memory for tpu_custom_call.1']
    #allocation5 [shape = 's32[2]{0}', space=sflag, size = 0x8, scoped, tag = 'scoped memory for tpu_custom_call.1']
    #allocation6 [shape = 'u8[1024]{0}', space=vmem, size = 0x400, scoped, tag = 'input window, operand 7']
    #allocation7 [shape = 's32[2]{0}', space=sflag, size = 0x8, scoped, tag = 'scoped memory for tpu_custom_call.1']
    #allocation8 [shape = 'u8[1024]{0}', space=vmem, size = 0x400, scoped, tag = 'input window, operand 8']
    #allocation9 [shape = 'u8[1024]{0}', space=vmem, size = 0x400, scoped, tag = 'input window, operand 10']
    #allocation10 [shape = 's32[2]{0}', space=sflag, size = 0x8, scoped, tag = 'scoped memory for tpu_custom_call.1']
    #allocation11 [shape = 'u8[1024]{0}', space=vmem, size = 0x400, scoped, tag = 'output window, operand 0']
    %20 = vsyncpa [#allocation4], 0
    %s21 = scalar_lea.sflag [#allocation4], 1
    %22 = vsyncpa %s21, 0
    %23 = vsyncpa [#allocation7], 0
    %s24 = scalar_lea.sflag [#allocation7], 1
    %25 = vsyncpa %s24, 0
    %26 = vsyncpa [#allocation10], 0
    %s27 = scalar_lea.sflag [#allocation10], 1
    %28 = vsyncpa %s27, 0
    %29 = vsyncpa [#allocation5], 0
    %s30 = scalar_lea.sflag [#allocation5], 1
    %31 = vsyncpa %s30, 0
    loop: start=0, step=1, limit=6
    $region2: #{tpu_custom_call.1} parent=1 // loop_pre_header
      _
    $region3: #{tpu_custom_call.1} parent=1 // loop_header
      %s33 = sphi 0, %s37
      %p34 = scmp.ge.s32.totalorder %s33, 6
      %s40 = sphi 0, %s52
      %s41 = sphi 0, %s48
      %s42 = sphi 0, %s40
      %s43 = sphi 0, %s41
      %s44 = sphi 0, %s42
      %s45 = sphi 0, %s43
      %s55 = sphi 0, %s57
      %s58 = sphi 0, %s55
      %s59 = sphi 0, %s58
      %s75 = sphi 0, %s59
      %s81 = sphi 0, %s83
      %s84 = sphi 0, %s81
      %s85 = sphi 0, %s84
      %s101 = sphi 0, %s85
      %s107 = sphi 0, %s109
      %s110 = sphi 0, %s107
      %s111 = sphi 0, %s110
      %s127 = sphi 0, %s111
      %s133 = sphi 0, %s135
      %s136 = sphi 0, %s133
      %s137 = sphi 0, %s136
      %s153 = sphi 0, %s137
      %s159 = sphi 0, %s161
      %s162 = sphi 0, %s159
      %s163 = sphi 0, %s162
      %s179 = sphi 0, %s163
      %s185 = sphi 0, %s187
      %s188 = sphi 0, %s185
      %s189 = sphi 0, %s188
      %s205 = sphi 0, %s189
      %s211 = sphi 0, %s213
      %s214 = sphi 0, %s211
      %s215 = sphi 0, %s214
      %s231 = sphi 0, %s215
      %s237 = sphi 0, %s239
      %s240 = sphi 0, %s237
      %s241 = sphi 0, %s240
      %s257 = sphi 0, %s241
      %s263 = sphi 0, %s265
      %s266 = sphi 0, %s263
      %s267 = sphi 0, %s266
      %s283 = sphi 0, %s267
      %s289 = sphi 0, %s291
      %s292 = sphi 0, %s289
      %s293 = sphi 0, %s292
      %s309 = sphi 0, %s293
      %s315 = sphi 0, %s317
      %s318 = sphi 0, %s315
      %s319 = sphi 0, %s318
      %s335 = sphi 0, %s319
      %s341 = sphi 0, %s343
      %s344 = sphi 0, %s341
      %s345 = sphi 0, %s344
      %s361 = sphi 0, %s345
      %s367 = sphi 0, %s369
      %s370 = sphi 0, %s367
      %s371 = sphi 0, %s370
      %s387 = sphi 0, %s371
      %s391 = sphi 0, %s391
      %s393 = sphi 0, %s391
      %s394 = sphi 0, %s393
      %s408 = sphi 0, %s394
      %s412 = sphi 0, %s412
      %s414 = sphi 0, %s412
      %s415 = sphi 0, %s414
      %s429 = sphi 0, %s415
      %s435 = sphi 0, %s437
      %s438 = sphi 0, %s435
      %s439 = sphi 0, %s438
      %s455 = sphi 0, %s439
    $region4: #{tpu_custom_call.1} parent=1 // loop_header_branch
      %36 = sbr.rel (%p34) target = $region8
    $region5: #{tpu_custom_call.1} parent=1 // loop_body
      %s38 = ssub.s32 %s33, 1
      %s39 = ssub.s32 %s33, 2
      %s46 = sadd.s32 1, %s41
      %p47 = scmp.ge.s32.totalorder %s46, 2
      %s48 = scalar_select %p47, 0, %s46
      %s49 = sadd.s32 1, %s40
      %s50 = scalar_select %p47, %s49, %s40
      %p51 = scmp.ge.s32.totalorder %s50, 2
      %s52 = scalar_select %p51, 0, %s50
      %s53 = ssub.s32 %s40, %s52
      %p54 = scmp.eq.s32.totalorder %s53, 0
      %s56 = sadd.s32 %s55, 1
      %s57 = scalar_select %p54, %s55, %s56
      %p60 = pneg %p54
      %p61 = scmp.eq.s32.totalorder %s33, 3
      %p62 = por %p60, %p61
      %p63 = scmp.ne.s32.totalorder %s55, %s58
      %p64 = scmp.eq.s32.totalorder %s33, 0
      %p65 = por %p63, %p64
      %p66 = scmp.ne.s32.totalorder %s55, %s58
      %p67 = scmp.eq.s32.totalorder %s38, 3
      %p68 = por %p66, %p67
      %p69 = scmp.ne.s32.totalorder %s58, %s59
      %p70 = scmp.eq.s32.totalorder %s38, 0
      %p71 = por %p69, %p70
      %p72 = scmp.ne.s32.totalorder %s58, %s59
      %p73 = scmp.eq.s32.totalorder %s39, 3
      %p74 = por %p72, %p73
      %p76 = scmp.ne.s32.totalorder %s59, %s75
      %p77 = scmp.eq.s32.totalorder %s39, 0
      %p78 = por %p76, %p77
      %s79 = ssub.s32 %s41, %s48
      %p80 = scmp.eq.s32.totalorder %s79, 0
      %s82 = sadd.s32 %s81, 1
      %s83 = scalar_select %p80, %s81, %s82
      %p86 = pneg %p80
      %p87 = scmp.eq.s32.totalorder %s33, 3
      %p88 = por %p86, %p87
      %p89 = scmp.ne.s32.totalorder %s81, %s84
      %p90 = scmp.eq.s32.totalorder %s33, 0
      %p91 = por %p89, %p90
      %p92 = scmp.ne.s32.totalorder %s81, %s84
      %p93 = scmp.eq.s32.totalorder %s38, 3
      %p94 = por %p92, %p93
      %p95 = scmp.ne.s32.totalorder %s84, %s85
      %p96 = scmp.eq.s32.totalorder %s38, 0
      %p97 = por %p95, %p96
      %p98 = scmp.ne.s32.totalorder %s84, %s85
      %p99 = scmp.eq.s32.totalorder %s39, 3
      %p100 = por %p98, %p99
      %p102 = scmp.ne.s32.totalorder %s85, %s101
      %p103 = scmp.eq.s32.totalorder %s39, 0
      %p104 = por %p102, %p103
      %s105 = ssub.s32 %s41, %s48
      %p106 = scmp.eq.s32.totalorder %s105, 0
      %s108 = sadd.s32 %s107, 1
      %s109 = scalar_select %p106, %s107, %s108
      %p112 = pneg %p106
      %p113 = scmp.eq.s32.totalorder %s33, 3
      %p114 = por %p112, %p113
      %p115 = scmp.ne.s32.totalorder %s107, %s110
      %p116 = scmp.eq.s32.totalorder %s33, 0
      %p117 = por %p115, %p116
      %p118 = scmp.ne.s32.totalorder %s107, %s110
      %p119 = scmp.eq.s32.totalorder %s38, 3
      %p120 = por %p118, %p119
      %p121 = scmp.ne.s32.totalorder %s110, %s111
      %p122 = scmp.eq.s32.totalorder %s38, 0
      %p123 = por %p121, %p122
      %p124 = scmp.ne.s32.totalorder %s110, %s111
      %p125 = scmp.eq.s32.totalorder %s39, 3
      %p126 = por %p124, %p125
      %p128 = scmp.ne.s32.totalorder %s111, %s127
      %p129 = scmp.eq.s32.totalorder %s39, 0
      %p130 = por %p128, %p129
      %s131 = ssub.s32 %s41, %s48
      %p132 = scmp.eq.s32.totalorder %s131, 0
      %s134 = sadd.s32 %s133, 1
      %s135 = scalar_select %p132, %s133, %s134
      %p138 = pneg %p132
      %p139 = scmp.eq.s32.totalorder %s33, 3
      %p140 = por %p138, %p139
      %p141 = scmp.ne.s32.totalorder %s133, %s136
      %p142 = scmp.eq.s32.totalorder %s33, 0
      %p143 = por %p141, %p142
      %p144 = scmp.ne.s32.totalorder %s133, %s136
      %p145 = scmp.eq.s32.totalorder %s38, 3
      %p146 = por %p144, %p145
      %p147 = scmp.ne.s32.totalorder %s136, %s137
      %p148 = scmp.eq.s32.totalorder %s38, 0
      %p149 = por %p147, %p148
      %p150 = scmp.ne.s32.totalorder %s136, %s137
      %p151 = scmp.eq.s32.totalorder %s39, 3
      %p152 = por %p150, %p151
      %p154 = scmp.ne.s32.totalorder %s137, %s153
      %p155 = scmp.eq.s32.totalorder %s39, 0
      %p156 = por %p154, %p155
      %s157 = ssub.s32 %s41, %s48
      %p158 = scmp.eq.s32.totalorder %s157, 0
      %s160 = sadd.s32 %s159, 1
      %s161 = scalar_select %p158, %s159, %s160
      %p164 = pneg %p158
      %p165 = scmp.eq.s32.totalorder %s33, 3
      %p166 = por %p164, %p165
      %p167 = scmp.ne.s32.totalorder %s159, %s162
      %p168 = scmp.eq.s32.totalorder %s33, 0
      %p169 = por %p167, %p168
      %p170 = scmp.ne.s32.totalorder %s159, %s162
      %p171 = scmp.eq.s32.totalorder %s38, 3
      %p172 = por %p170, %p171
      %p173 = scmp.ne.s32.totalorder %s162, %s163
      %p174 = scmp.eq.s32.totalorder %s38, 0
      %p175 = por %p173, %p174
      %p176 = scmp.ne.s32.totalorder %s162, %s163
      %p177 = scmp.eq.s32.totalorder %s39, 3
      %p178 = por %p176, %p177
      %p180 = scmp.ne.s32.totalorder %s163, %s179
      %p181 = scmp.eq.s32.totalorder %s39, 0
      %p182 = por %p180, %p181
      %s183 = ssub.s32 %s41, %s48
      %p184 = scmp.eq.s32.totalorder %s183, 0
      %s186 = sadd.s32 %s185, 1
      %s187 = scalar_select %p184, %s185, %s186
      %p190 = pneg %p184
      %p191 = scmp.eq.s32.totalorder %s33, 3
      %p192 = por %p190, %p191
      %p193 = scmp.ne.s32.totalorder %s185, %s188
      %p194 = scmp.eq.s32.totalorder %s33, 0
      %p195 = por %p193, %p194
      %p196 = scmp.ne.s32.totalorder %s185, %s188
      %p197 = scmp.eq.s32.totalorder %s38, 3
      %p198 = por %p196, %p197
      %p199 = scmp.ne.s32.totalorder %s188, %s189
      %p200 = scmp.eq.s32.totalorder %s38, 0
      %p201 = por %p199, %p200
      %p202 = scmp.ne.s32.totalorder %s188, %s189
      %p203 = scmp.eq.s32.totalorder %s39, 3
      %p204 = por %p202, %p203
      %p206 = scmp.ne.s32.totalorder %s189, %s205
      %p207 = scmp.eq.s32.totalorder %s39, 0
      %p208 = por %p206, %p207
      %s209 = ssub.s32 %s41, %s48
      %p210 = scmp.eq.s32.totalorder %s209, 0
      %s212 = sadd.s32 %s211, 1
      %s213 = scalar_select %p210, %s211, %s212
      %p216 = pneg %p210
      %p217 = scmp.eq.s32.totalorder %s33, 3
      %p218 = por %p216, %p217
      %p219 = scmp.ne.s32.totalorder %s211, %s214
      %p220 = scmp.eq.s32.totalorder %s33, 0
      %p221 = por %p219, %p220
      %p222 = scmp.ne.s32.totalorder %s211, %s214
      %p223 = scmp.eq.s32.totalorder %s38, 3
      %p224 = por %p222, %p223
      %p225 = scmp.ne.s32.totalorder %s214, %s215
      %p226 = scmp.eq.s32.totalorder %s38, 0
      %p227 = por %p225, %p226
      %p228 = scmp.ne.s32.totalorder %s214, %s215
      %p229 = scmp.eq.s32.totalorder %s39, 3
      %p230 = por %p228, %p229
      %p232 = scmp.ne.s32.totalorder %s215, %s231
      %p233 = scmp.eq.s32.totalorder %s39, 0
      %p234 = por %p232, %p233
      %s235 = ssub.s32 %s41, %s48
      %p236 = scmp.eq.s32.totalorder %s235, 0
      %s238 = sadd.s32 %s237, 1
      %s239 = scalar_select %p236, %s237, %s238
      %p242 = pneg %p236
      %p243 = scmp.eq.s32.totalorder %s33, 3
      %p244 = por %p242, %p243
      %p245 = scmp.ne.s32.totalorder %s237, %s240
      %p246 = scmp.eq.s32.totalorder %s33, 0
      %p247 = por %p245, %p246
      %p248 = scmp.ne.s32.totalorder %s237, %s240
      %p249 = scmp.eq.s32.totalorder %s38, 3
      %p250 = por %p248, %p249
      %p251 = scmp.ne.s32.totalorder %s240, %s241
      %p252 = scmp.eq.s32.totalorder %s38, 0
      %p253 = por %p251, %p252
      %p254 = scmp.ne.s32.totalorder %s240, %s241
      %p255 = scmp.eq.s32.totalorder %s39, 3
      %p256 = por %p254, %p255
      %p258 = scmp.ne.s32.totalorder %s241, %s257
      %p259 = scmp.eq.s32.totalorder %s39, 0
      %p260 = por %p258, %p259
      %s261 = ssub.s32 %s41, %s48
      %p262 = scmp.eq.s32.totalorder %s261, 0
      %s264 = sadd.s32 %s263, 1
      %s265 = scalar_select %p262, %s263, %s264
      %p268 = pneg %p262
      %p269 = scmp.eq.s32.totalorder %s33, 3
      %p270 = por %p268, %p269
      %p271 = scmp.ne.s32.totalorder %s263, %s266
      %p272 = scmp.eq.s32.totalorder %s33, 0
      %p273 = por %p271, %p272
      %p274 = scmp.ne.s32.totalorder %s263, %s266
      %p275 = scmp.eq.s32.totalorder %s38, 3
      %p276 = por %p274, %p275
      %p277 = scmp.ne.s32.totalorder %s266, %s267
      %p278 = scmp.eq.s32.totalorder %s38, 0
      %p279 = por %p277, %p278
      %p280 = scmp.ne.s32.totalorder %s266, %s267
      %p281 = scmp.eq.s32.totalorder %s39, 3
      %p282 = por %p280, %p281
      %p284 = scmp.ne.s32.totalorder %s267, %s283
      %p285 = scmp.eq.s32.totalorder %s39, 0
      %p286 = por %p284, %p285
      %s287 = ssub.s32 %s41, %s48
      %p288 = scmp.eq.s32.totalorder %s287, 0
      %s290 = sadd.s32 %s289, 1
      %s291 = scalar_select %p288, %s289, %s290
      %p294 = pneg %p288
      %p295 = scmp.eq.s32.totalorder %s33, 3
      %p296 = por %p294, %p295
      %p297 = scmp.ne.s32.totalorder %s289, %s292
      %p298 = scmp.eq.s32.totalorder %s33, 0
      %p299 = por %p297, %p298
      %p300 = scmp.ne.s32.totalorder %s289, %s292
      %p301 = scmp.eq.s32.totalorder %s38, 3
      %p302 = por %p300, %p301
      %p303 = scmp.ne.s32.totalorder %s292, %s293
      %p304 = scmp.eq.s32.totalorder %s38, 0
      %p305 = por %p303, %p304
      %p306 = scmp.ne.s32.totalorder %s292, %s293
      %p307 = scmp.eq.s32.totalorder %s39, 3
      %p308 = por %p306, %p307
      %p310 = scmp.ne.s32.totalorder %s293, %s309
      %p311 = scmp.eq.s32.totalorder %s39, 0
      %p312 = por %p310, %p311
      %s313 = ssub.s32 %s41, %s48
      %p314 = scmp.eq.s32.totalorder %s313, 0
      %s316 = sadd.s32 %s315, 1
      %s317 = scalar_select %p314, %s315, %s316
      %p320 = pneg %p314
      %p321 = scmp.eq.s32.totalorder %s33, 3
      %p322 = por %p320, %p321
      %p323 = scmp.ne.s32.totalorder %s315, %s318
      %p324 = scmp.eq.s32.totalorder %s33, 0
      %p325 = por %p323, %p324
      %p326 = scmp.ne.s32.totalorder %s315, %s318
      %p327 = scmp.eq.s32.totalorder %s38, 3
      %p328 = por %p326, %p327
      %p329 = scmp.ne.s32.totalorder %s318, %s319
      %p330 = scmp.eq.s32.totalorder %s38, 0
      %p331 = por %p329, %p330
      %p332 = scmp.ne.s32.totalorder %s318, %s319
      %p333 = scmp.eq.s32.totalorder %s39, 3
      %p334 = por %p332, %p333
      %p336 = scmp.ne.s32.totalorder %s319, %s335
      %p337 = scmp.eq.s32.totalorder %s39, 0
      %p338 = por %p336, %p337
      %s339 = ssub.s32 %s41, %s48
      %p340 = scmp.eq.s32.totalorder %s339, 0
      %s342 = sadd.s32 %s341, 1
      %s343 = scalar_select %p340, %s341, %s342
      %p346 = pneg %p340
      %p347 = scmp.eq.s32.totalorder %s33, 3
      %p348 = por %p346, %p347
      %p349 = scmp.ne.s32.totalorder %s341, %s344
      %p350 = scmp.eq.s32.totalorder %s33, 0
      %p351 = por %p349, %p350
      %p352 = scmp.ne.s32.totalorder %s341, %s344
      %p353 = scmp.eq.s32.totalorder %s38, 3
      %p354 = por %p352, %p353
      %p355 = scmp.ne.s32.totalorder %s344, %s345
      %p356 = scmp.eq.s32.totalorder %s38, 0
      %p357 = por %p355, %p356
      %p358 = scmp.ne.s32.totalorder %s344, %s345
      %p359 = scmp.eq.s32.totalorder %s39, 3
      %p360 = por %p358, %p359
      %p362 = scmp.ne.s32.totalorder %s345, %s361
      %p363 = scmp.eq.s32.totalorder %s39, 0
      %p364 = por %p362, %p363
      %s365 = ssub.s32 %s41, %s48
      %p366 = scmp.eq.s32.totalorder %s365, 0
      %s368 = sadd.s32 %s367, 1
      %s369 = scalar_select %p366, %s367, %s368
      %p372 = pneg %p366
      %p373 = scmp.eq.s32.totalorder %s33, 3
      %p374 = por %p372, %p373
      %p375 = scmp.ne.s32.totalorder %s367, %s370
      %p376 = scmp.eq.s32.totalorder %s33, 0
      %p377 = por %p375, %p376
      %p378 = scmp.ne.s32.totalorder %s367, %s370
      %p379 = scmp.eq.s32.totalorder %s38, 3
      %p380 = por %p378, %p379
      %p381 = scmp.ne.s32.totalorder %s370, %s371
      %p382 = scmp.eq.s32.totalorder %s38, 0
      %p383 = por %p381, %p382
      %p384 = scmp.ne.s32.totalorder %s370, %s371
      %p385 = scmp.eq.s32.totalorder %s39, 3
      %p386 = por %p384, %p385
      %p388 = scmp.ne.s32.totalorder %s371, %s387
      %p389 = scmp.eq.s32.totalorder %s39, 0
      %p390 = por %p388, %p389
      %s392 = sadd.s32 %s391, 1
      %p395 = scmp.eq.s32.totalorder %s33, 3
      %p396 = scmp.ne.s32.totalorder %s391, %s393
      %p397 = scmp.eq.s32.totalorder %s33, 0
      %p398 = por %p396, %p397
      %p399 = scmp.ne.s32.totalorder %s391, %s393
      %p400 = scmp.eq.s32.totalorder %s38, 3
      %p401 = por %p399, %p400
      %p402 = scmp.ne.s32.totalorder %s393, %s394
      %p403 = scmp.eq.s32.totalorder %s38, 0
      %p404 = por %p402, %p403
      %p405 = scmp.ne.s32.totalorder %s393, %s394
      %p406 = scmp.eq.s32.totalorder %s39, 3
      %p407 = por %p405, %p406
      %p409 = scmp.ne.s32.totalorder %s394, %s408
      %p410 = scmp.eq.s32.totalorder %s39, 0
      %p411 = por %p409, %p410
      %s413 = sadd.s32 %s412, 1
      %p416 = scmp.eq.s32.totalorder %s33, 3
      %p417 = scmp.ne.s32.totalorder %s412, %s414
      %p418 = scmp.eq.s32.totalorder %s33, 0
      %p419 = por %p417, %p418
      %p420 = scmp.ne.s32.totalorder %s412, %s414
      %p421 = scmp.eq.s32.totalorder %s38, 3
      %p422 = por %p420, %p421
      %p423 = scmp.ne.s32.totalorder %s414, %s415
      %p424 = scmp.eq.s32.totalorder %s38, 0
      %p425 = por %p423, %p424
      %p426 = scmp.ne.s32.totalorder %s414, %s415
      %p427 = scmp.eq.s32.totalorder %s39, 3
      %p428 = por %p426, %p427
      %p430 = scmp.ne.s32.totalorder %s415, %s429
      %p431 = scmp.eq.s32.totalorder %s39, 0
      %p432 = por %p430, %p431
      %s433 = ssub.s32 %s40, %s52
      %p434 = scmp.eq.s32.totalorder %s433, 0
      %s436 = sadd.s32 %s435, 1
      %s437 = scalar_select %p434, %s435, %s436
      %p440 = pneg %p434
      %p441 = scmp.eq.s32.totalorder %s33, 3
      %p442 = por %p440, %p441
      %p443 = scmp.ne.s32.totalorder %s435, %s438
      %p444 = scmp.eq.s32.totalorder %s33, 0
      %p445 = por %p443, %p444
      %p446 = scmp.ne.s32.totalorder %s435, %s438
      %p447 = scmp.eq.s32.totalorder %s38, 3
      %p448 = por %p446, %p447
      %p449 = scmp.ne.s32.totalorder %s438, %s439
      %p450 = scmp.eq.s32.totalorder %s38, 0
      %p451 = por %p449, %p450
      %p452 = scmp.ne.s32.totalorder %s438, %s439
      %p453 = scmp.eq.s32.totalorder %s39, 3
      %p454 = por %p452, %p453
      %p456 = scmp.ne.s32.totalorder %s439, %s455
      %p457 = scmp.eq.s32.totalorder %s39, 0
      %p458 = por %p456, %p457
      %p459 = scmp.le.s32.totalorder 1, %s33
      %p460 = scmp.lt.s32.totalorder %s33, 5
      %p461 = pnand %p459, %p460
      %p462 = pneg %p461
      // Predicated region
      $region9: #{tpu_custom_call.1} parent=5 // pred_check
        _
      $region10: #{tpu_custom_call.1} parent=5 // pred_check_branch
        %464 = sbr.rel (%p461) target = $region12
      $region11: #{tpu_custom_call.1} parent=5 // pred_region
        %s465 = ssub.s32 %s33, 1
        // Predicated region
        $region13: #{tpu_custom_call.1} parent=11 // pred_check
          %p466 = pneg %p404
        $region14: #{tpu_custom_call.1} parent=11 // pred_check_branch
          %468 = sbr.rel (%p466) target = $region16
        $region15: #{tpu_custom_call.1} parent=11 // pred_region
          _
        $region16: #{tpu_custom_call.1} parent=11 // pred_fallthru
          _
        // Predicated region
        $region17: #{tpu_custom_call.1} parent=11 // pred_check
          %p469 = pneg %p425
        $region18: #{tpu_custom_call.1} parent=11 // pred_check_branch
          %471 = sbr.rel (%p469) target = $region20
        $region19: #{tpu_custom_call.1} parent=11 // pred_region
          _
        $region20: #{tpu_custom_call.1} parent=11 // pred_fallthru
          _
      $region12: #{tpu_custom_call.1} parent=5 // pred_fallthru
        _
      %p472 = scmp.lt.s32.totalorder %s33, 4
      // Predicated region
      $region21: #{tpu_custom_call.1} parent=5 // pred_check
        %p473 = pneg %p472
      $region22: #{tpu_custom_call.1} parent=5 // pred_check_branch
        %475 = sbr.rel (%p473) target = $region24
      $region23: #{tpu_custom_call.1} parent=5 // pred_region
        // Predicated region
        $region25: #{tpu_custom_call.1} parent=23 // pred_check
          %p476 = pneg %p65
        $region26: #{tpu_custom_call.1} parent=23 // pred_check_branch
          %478 = sbr.rel (%p476) target = $region28
        $region27: #{tpu_custom_call.1} parent=23 // pred_region
          %s479 = sand.u32 %s55, 1
          %s480 = scalar_lea.sflag [#allocation4], %s479
          %s481 = sand.u32 %s55, 1
          %s482 = smul.addr %s481, 8
          %s483 = scalar_lea.vmem [#allocation3], %s482
          %s485 = ssub.s32 128, 128
          %486 = vsyncadd %s480, %s485
          %s487 = smul.addr %s40, 128
          %s488 = scalar_lea.hbm %s0, %s487
          %s490 = sshll.u32 %s483, 4
          %s491 = int_to_ptr.vmem [resolvable:$true] %s490
          %493 = dma.hbm_to_vmem [thread:$0]  %s488, 128, %s491, %s480
        $region28: #{tpu_custom_call.1} parent=23 // pred_fallthru
          _
        // Predicated region
        $region29: #{tpu_custom_call.1} parent=23 // pred_check
          %p494 = pneg %p91
        $region30: #{tpu_custom_call.1} parent=23 // pred_check_branch
          %496 = sbr.rel (%p494) target = $region32
        $region31: #{tpu_custom_call.1} parent=23 // pred_region
          %p497 = scmp.lt.s32.totalorder %s41, 1
          %s498 = scalar_select %p497, %s41, 1
          %s499 = scalar_lea.vmem %s1, %s498
        $region32: #{tpu_custom_call.1} parent=23 // pred_fallthru
          _
        // Predicated region
        $region33: #{tpu_custom_call.1} parent=23 // pred_check
          %p500 = pneg %p117
        $region34: #{tpu_custom_call.1} parent=23 // pred_check_branch
          %502 = sbr.rel (%p500) target = $region36
        $region35: #{tpu_custom_call.1} parent=23 // pred_region
          %p503 = scmp.lt.s32.totalorder %s41, 1
          %s504 = scalar_select %p503, %s41, 1
          %s505 = scalar_lea.vmem %s2, %s504
        $region36: #{tpu_custom_call.1} parent=23 // pred_fallthru
          _
        // Predicated region
        $region37: #{tpu_custom_call.1} parent=23 // pred_check
          %p506 = pneg %p143
        $region38: #{tpu_custom_call.1} parent=23 // pred_check_branch
          %508 = sbr.rel (%p506) target = $region40
        $region39: #{tpu_custom_call.1} parent=23 // pred_region
          %p509 = scmp.lt.s32.totalorder %s41, 1
          %s510 = scalar_select %p509, %s41, 1
          %s511 = smul.addr %s510, 4
          %s512 = smul.addr %s511, 4
          %s513 = scalar_lea.vmem %s3, %s512
        $region40: #{tpu_custom_call.1} parent=23 // pred_fallthru
          _
        // Predicated region
        $region41: #{tpu_custom_call.1} parent=23 // pred_check
          %p514 = pneg %p169
        $region42: #{tpu_custom_call.1} parent=23 // pred_check_branch
          %516 = sbr.rel (%p514) target = $region44
        $region43: #{tpu_custom_call.1} parent=23 // pred_region
          %p517 = scmp.lt.s32.totalorder %s41, 1
          %s518 = scalar_select %p517, %s41, 1
          %s519 = scalar_lea.vmem %s4, %s518
        $region44: #{tpu_custom_call.1} parent=23 // pred_fallthru
          _
        // Predicated region
        $region45: #{tpu_custom_call.1} parent=23 // pred_check
          %p520 = pneg %p195
        $region46: #{tpu_custom_call.1} parent=23 // pred_check_branch
          %522 = sbr.rel (%p520) target = $region48
        $region47: #{tpu_custom_call.1} parent=23 // pred_region
          %p523 = scmp.lt.s32.totalorder %s41, 1
          %s524 = scalar_select %p523, %s41, 1
          %s525 = smul.addr %s524, 4
          %s526 = smul.addr %s525, 4
          %s527 = scalar_lea.vmem %s5, %s526
        $region48: #{tpu_custom_call.1} parent=23 // pred_fallthru
          _
        // Predicated region
        $region49: #{tpu_custom_call.1} parent=23 // pred_check
          %p528 = pneg %p221
        $region50: #{tpu_custom_call.1} parent=23 // pred_check_branch
          %530 = sbr.rel (%p528) target = $region52
        $region51: #{tpu_custom_call.1} parent=23 // pred_region
          %p531 = scmp.lt.s32.totalorder %s41, 1
          %s532 = scalar_select %p531, %s41, 1
          %s533 = scalar_lea.vmem %s6, %s532
        $region52: #{tpu_custom_call.1} parent=23 // pred_fallthru
          _
        // Predicated region
        $region53: #{tpu_custom_call.1} parent=23 // pred_check
          %p534 = pneg %p247
        $region54: #{tpu_custom_call.1} parent=23 // pred_check_branch
          %536 = sbr.rel (%p534) target = $region56
        $region55: #{tpu_custom_call.1} parent=23 // pred_region
          %s537 = sand.u32 %s33, 1
          %s538 = scalar_lea.sflag [#allocation7], %s537
          %s539 = sand.u32 %s237, 1
          %s540 = scalar_lea.vmem [#allocation6], %s539
          %s542 = ssub.s32 16, 16
          %543 = vsyncadd %s538, %s542
          %s544 = smul.addr %s41, 16
          %s545 = scalar_lea.hbm %s7, %s544
          %s547 = sshll.u32 %s540, 4
          %s548 = int_to_ptr.vmem [resolvable:$true] %s547
          %550 = dma.hbm_to_vmem [thread:$0]  %s545, 16, %s548, %s538
        $region56: #{tpu_custom_call.1} parent=23 // pred_fallthru
          _
        // Predicated region
        $region57: #{tpu_custom_call.1} parent=23 // pred_check
          %p551 = pneg %p273
        $region58: #{tpu_custom_call.1} parent=23 // pred_check_branch
          %553 = sbr.rel (%p551) target = $region60
        $region59: #{tpu_custom_call.1} parent=23 // pred_region
          %s554 = sand.u32 %s33, 1
          %s555 = scalar_lea.sflag [#allocation7], %s554
          %s556 = sand.u32 %s263, 1
          %s557 = scalar_lea.vmem [#allocation8], %s556
          %s559 = ssub.s32 16, 16
          %560 = vsyncadd %s555, %s559
          %s561 = smul.addr %s41, 16
          %s562 = scalar_lea.hbm %s8, %s561
          %s564 = sshll.u32 %s557, 4
          %s565 = int_to_ptr.vmem [resolvable:$true] %s564
          %567 = dma.hbm_to_vmem [thread:$0]  %s562, 16, %s565, %s555
        $region60: #{tpu_custom_call.1} parent=23 // pred_fallthru
          _
        // Predicated region
        $region61: #{tpu_custom_call.1} parent=23 // pred_check
          %p568 = pneg %p299
        $region62: #{tpu_custom_call.1} parent=23 // pred_check_branch
          %570 = sbr.rel (%p568) target = $region64
        $region63: #{tpu_custom_call.1} parent=23 // pred_region
          %p571 = scmp.lt.s32.totalorder %s41, 1
          %s572 = scalar_select %p571, %s41, 1
          %s573 = smul.addr %s572, 4
          %s574 = smul.addr %s573, 4
          %s575 = scalar_lea.vmem %s9, %s574
        $region64: #{tpu_custom_call.1} parent=23 // pred_fallthru
          _
        // Predicated region
        $region65: #{tpu_custom_call.1} parent=23 // pred_check
          %p576 = pneg %p325
        $region66: #{tpu_custom_call.1} parent=23 // pred_check_branch
          %578 = sbr.rel (%p576) target = $region68
        $region67: #{tpu_custom_call.1} parent=23 // pred_region
          %s579 = sand.u32 %s315, 1
          %s580 = scalar_lea.sflag [#allocation10], %s579
          %s581 = sand.u32 %s315, 1
          %s582 = scalar_lea.vmem [#allocation9], %s581
          %s584 = ssub.s32 16, 16
          %585 = vsyncadd %s580, %s584
          %s586 = smul.addr %s41, 16
          %s587 = scalar_lea.hbm %s10, %s586
          %s589 = sshll.u32 %s582, 4
          %s590 = int_to_ptr.vmem [resolvable:$true] %s589
          %592 = dma.hbm_to_vmem [thread:$0]  %s587, 16, %s590, %s580
        $region68: #{tpu_custom_call.1} parent=23 // pred_fallthru
          _
        // Predicated region
        $region69: #{tpu_custom_call.1} parent=23 // pred_check
          %p593 = pneg %p351
        $region70: #{tpu_custom_call.1} parent=23 // pred_check_branch
          %595 = sbr.rel (%p593) target = $region72
        $region71: #{tpu_custom_call.1} parent=23 // pred_region
          %p596 = scmp.lt.s32.totalorder %s41, 1
          %s597 = scalar_select %p596, %s41, 1
          %s598 = smul.addr %s597, 8
          %s599 = smul.addr %s598, 4
          %s600 = scalar_lea.vmem %s11, %s599
        $region72: #{tpu_custom_call.1} parent=23 // pred_fallthru
          _
        // Predicated region
        $region73: #{tpu_custom_call.1} parent=23 // pred_check
          %p601 = pneg %p377
        $region74: #{tpu_custom_call.1} parent=23 // pred_check_branch
          %603 = sbr.rel (%p601) target = $region76
        $region75: #{tpu_custom_call.1} parent=23 // pred_region
          %p604 = scmp.lt.s32.totalorder %s41, 1
          %s605 = scalar_select %p604, %s41, 1
          %s606 = scalar_lea.vmem %s12, %s605
        $region76: #{tpu_custom_call.1} parent=23 // pred_fallthru
          _
      $region24: #{tpu_custom_call.1} parent=5 // pred_fallthru
        _
      %p607 = scmp.le.s32.totalorder 1, %s33
      %p608 = scmp.lt.s32.totalorder %s33, 5
      %p609 = pnand %p607, %p608
      %p610 = pneg %p609
      // Predicated region
      $region77: #{tpu_custom_call.1} parent=5 // pred_check
        _
      $region78: #{tpu_custom_call.1} parent=5 // pred_check_branch
        %612 = sbr.rel (%p609) target = $region80
      $region79: #{tpu_custom_call.1} parent=5 // pred_region
        %s613 = ssub.s32 %s33, 1
        %s614 = sand.u32 %s58, 1
        %s615 = scalar_lea.sflag [#allocation4], %s614
        %s616 = sand.u32 %s58, 1
        %s617 = smul.addr %s616, 8
        %s618 = scalar_lea.vmem [#allocation3], %s617
        // Predicated region
        $region81: #{tpu_custom_call.1} parent=79 // pred_check
          %p619 = pneg %p71
        $region82: #{tpu_custom_call.1} parent=79 // pred_check_branch
          %621 = sbr.rel (%p619) target = $region84
        $region83: #{tpu_custom_call.1} parent=79 // pred_region
          %622 = dma.done %s615, 128
        $region84: #{tpu_custom_call.1} parent=79 // pred_fallthru
          _
        %s623 = sand.u32 %s38, 1
        %s624 = scalar_lea.sflag [#allocation7], %s623
        %s625 = sand.u32 %s240, 1
        %s626 = scalar_lea.vmem [#allocation6], %s625
        // Predicated region
        $region85: #{tpu_custom_call.1} parent=79 // pred_check
          %p627 = pneg %p253
        $region86: #{tpu_custom_call.1} parent=79 // pred_check_branch
          %629 = sbr.rel (%p627) target = $region88
        $region87: #{tpu_custom_call.1} parent=79 // pred_region
          %630 = dma.done %s624, 16
        $region88: #{tpu_custom_call.1} parent=79 // pred_fallthru
          _
        %s631 = sand.u32 %s38, 1
        %s632 = scalar_lea.sflag [#allocation7], %s631
        %s633 = sand.u32 %s266, 1
        %s634 = scalar_lea.vmem [#allocation8], %s633
        // Predicated region
        $region89: #{tpu_custom_call.1} parent=79 // pred_check
          %p635 = pneg %p279
        $region90: #{tpu_custom_call.1} parent=79 // pred_check_branch
          %637 = sbr.rel (%p635) target = $region92
        $region91: #{tpu_custom_call.1} parent=79 // pred_region
          %638 = dma.done %s632, 16
        $region92: #{tpu_custom_call.1} parent=79 // pred_fallthru
          _
        %s639 = sand.u32 %s318, 1
        %s640 = scalar_lea.sflag [#allocation10], %s639
        %s641 = sand.u32 %s318, 1
        %s642 = scalar_lea.vmem [#allocation9], %s641
        // Predicated region
        $region93: #{tpu_custom_call.1} parent=79 // pred_check
          %p643 = pneg %p331
        $region94: #{tpu_custom_call.1} parent=79 // pred_check_branch
          %645 = sbr.rel (%p643) target = $region96
        $region95: #{tpu_custom_call.1} parent=79 // pred_region
          %646 = dma.done %s640, 16
        $region96: #{tpu_custom_call.1} parent=79 // pred_fallthru
          _
        %s647 = sand.u32 %s58, 1
        %s648 = scalar_lea.sflag [#allocation4], %s647
        %s649 = sand.u32 %s58, 1
        %s650 = smul.addr %s649, 8
        %s651 = scalar_lea.vmem [#allocation3], %s650
        %p652 = pneg %p71
        %p653 = pneg %p68
        %p654 = scmp.lt.s32.totalorder %s43, 1
        %s655 = scalar_select %p654, %s43, 1
        %s656 = scalar_lea.vmem %s1, %s655
        %p657 = pneg %p97
        %p658 = pneg %p94
        %p659 = scmp.lt.s32.totalorder %s43, 1
        %s660 = scalar_select %p659, %s43, 1
        %s661 = scalar_lea.vmem %s2, %s660
        %p662 = pneg %p123
        %p663 = pneg %p120
        %p664 = scmp.lt.s32.totalorder %s43, 1
        %s665 = scalar_select %p664, %s43, 1
        %s666 = smul.addr %s665, 4
        %s667 = smul.addr %s666, 4
        %s668 = scalar_lea.vmem %s3, %s667
        %p669 = pneg %p149
        %p670 = pneg %p146
        %p671 = scmp.lt.s32.totalorder %s43, 1
        %s672 = scalar_select %p671, %s43, 1
        %s673 = scalar_lea.vmem %s4, %s672
        %p674 = pneg %p175
        %p675 = pneg %p172
        %p676 = scmp.lt.s32.totalorder %s43, 1
        %s677 = scalar_select %p676, %s43, 1
        %s678 = smul.addr %s677, 4
        %s679 = smul.addr %s678, 4
        %s680 = scalar_lea.vmem %s5, %s679
        %p681 = pneg %p201
        %p682 = pneg %p198
        %p683 = scmp.lt.s32.totalorder %s43, 1
        %s684 = scalar_select %p683, %s43, 1
        %s685 = scalar_lea.vmem %s6, %s684
        %p686 = pneg %p227
        %p687 = pneg %p224
        %s688 = sand.u32 %s38, 1
        %s689 = scalar_lea.sflag [#allocation7], %s688
        %s690 = sand.u32 %s240, 1
        %s691 = scalar_lea.vmem [#allocation6], %s690
        %p692 = pneg %p253
        %p693 = pneg %p250
        %s694 = sand.u32 %s38, 1
        %s695 = scalar_lea.sflag [#allocation7], %s694
        %s696 = sand.u32 %s266, 1
        %s697 = scalar_lea.vmem [#allocation8], %s696
        %p698 = pneg %p279
        %p699 = pneg %p276
        %p700 = scmp.lt.s32.totalorder %s43, 1
        %s701 = scalar_select %p700, %s43, 1
        %s702 = smul.addr %s701, 4
        %s703 = smul.addr %s702, 4
        %s704 = scalar_lea.vmem %s9, %s703
        %p705 = pneg %p305
        %p706 = pneg %p302
        %s707 = sand.u32 %s318, 1
        %s708 = scalar_lea.sflag [#allocation10], %s707
        %s709 = sand.u32 %s318, 1
        %s710 = scalar_lea.vmem [#allocation9], %s709
        %p711 = pneg %p331
        %p712 = pneg %p328
        %p713 = scmp.lt.s32.totalorder %s43, 1
        %s714 = scalar_select %p713, %s43, 1
        %s715 = smul.addr %s714, 8
        %s716 = smul.addr %s715, 4
        %s717 = scalar_lea.vmem %s11, %s716
        %p718 = pneg %p357
        %p719 = pneg %p354
        %p720 = scmp.lt.s32.totalorder %s43, 1
        %s721 = scalar_select %p720, %s43, 1
        %s722 = scalar_lea.vmem %s12, %s721
        %p723 = pneg %p383
        %p724 = pneg %p380
        %p725 = pneg %p404
        %p726 = pneg %p401
        %p727 = pneg %p425
        %p728 = pneg %p422
        %p729 = pneg %p451
        %p730 = pneg %p448
        %s731 = sand.u32 %s438, 1
        %s732 = scalar_lea.sflag [#allocation5], %s731
        %s733 = sand.u32 %s438, 1
        %s734 = scalar_lea.vmem [#allocation11], %s733
        %p735 = scmp.lt.s32.totalorder %s43, 1
        %s736 = scalar_select %p735, %s43, 1
        %s737 = scalar_lea.vmem %s1, %s736
        %p738 = scmp.lt.s32.totalorder %s43, 1
        %s739 = scalar_select %p738, %s43, 1
        %s740 = scalar_lea.vmem %s2, %s739
        %p741 = scmp.lt.s32.totalorder %s43, 1
        %s742 = scalar_select %p741, %s43, 1
        %s743 = smul.addr %s742, 4
        %s744 = smul.addr %s743, 4
        %s745 = scalar_lea.vmem %s3, %s744
        %p746 = scmp.lt.s32.totalorder %s43, 1
        %s747 = scalar_select %p746, %s43, 1
        %s748 = scalar_lea.vmem %s4, %s747
        %p749 = scmp.lt.s32.totalorder %s43, 1
        %s750 = scalar_select %p749, %s43, 1
        %s751 = smul.addr %s750, 4
        %s752 = smul.addr %s751, 4
        %s753 = scalar_lea.vmem %s5, %s752
        %p754 = scmp.lt.s32.totalorder %s43, 1
        %s755 = scalar_select %p754, %s43, 1
        %s756 = scalar_lea.vmem %s6, %s755
        %p757 = scmp.lt.s32.totalorder %s43, 1
        %s758 = scalar_select %p757, %s43, 1
        %s759 = smul.addr %s758, 4
        %s760 = smul.addr %s759, 4
        %s761 = scalar_lea.vmem %s9, %s760
        %p762 = scmp.lt.s32.totalorder %s43, 1
        %s763 = scalar_select %p762, %s43, 1
        %s764 = smul.addr %s763, 8
        %s765 = smul.addr %s764, 4
        %s766 = scalar_lea.vmem %s11, %s765
        %p767 = scmp.lt.s32.totalorder %s43, 1
        %s768 = scalar_select %p767, %s43, 1
        %s769 = scalar_lea.vmem %s12, %s768
        %p771 = scmp.eq.s32.totalorder %s43, 0
        // Predicated region
        $region97: #{tpu_custom_call.1} parent=79 // pred_check
          %p772 = pneg %p771
        $region98: #{tpu_custom_call.1} parent=79 // pred_check_branch
          %774 = sbr.rel (%p772) target = $region100
        $region99: #{tpu_custom_call.1} parent=79 // pred_region
          %v775 = vld [vmem:[%s618] sm:$0xff]
          %vm776 = vcmask 261120
          %777 = vst.msk [vmem:[#allocation2] sm:$0xff] %vm776, %v775
        $region100: #{tpu_custom_call.1} parent=79 // pred_fallthru
          _
        %v778 = vld [vmem:[#allocation2] sm:$0xff]
        %v779 = vld [vmem:[%s737] sm:$0x1]
        %v780 = vld [vmem:[%s740] sm:$0x1]
        %vm781 = vcmask 261120
        %v782 = vsel %vm781, %v778, 0.0
        %783 = vadd.xlane.f32.xlu0 %v782
        %v784 = vpop.xlane.xlu0 %783
        %v785 = vrcp.pop 32.0
        %v786 = vmul.f32 %v784, %v785
        %v787 = vsub.f32 %v778, %v786
        %v788 = vmul.f32 %v787, %v787
        %v789 = vsel %vm781, %v788, 0.0
        %790 = vadd.xlane.f32.xlu0 %v789
        %v791 = vpop.xlane.xlu0 %790
        %v792 = vmul.f32 %v791, %v785
        %v793 = vadd.f32 %v792, 1e-05
        %v794 = vrsqrt.pop %v793
        %v795 = vmul.f32 %v787, %v794
        %v797 = vlaneseq
        %v798 = vshrl.u32 %v797, 7
        %v799 = vsub.s32 0, %v798
        %v800 = vrot.slane %v779, %v799
        %v802 = vmul.f32 %v795, %v800
        %v804 = vlaneseq
        %v805 = vshrl.u32 %v804, 7
        %v806 = vsub.s32 0, %v805
        %v807 = vrot.slane %v780, %v806
        %v809 = vadd.f32 %v802, %v807
        %v810 = vpack.c.bf16 %v809, %v809
        %v811 = vld [vmem:[%s745] sm:$0xf]
        %v812 = vld [vmem:[%s745 + $0x4] sm:$0xf]
        %v813 = vld [vmem:[%s745 + $0x8] sm:$0xf]
        %v814 = vld [vmem:[%s745 + $0xc] sm:$0xf]
        %v815 = vld [vmem:[%s748] sm:$0x1]
        %v817 = vlaneseq
        %v818 = vshrl.u32 %v817, 7
        %v819 = vsub.s32 0, %v818
        %v820 = vrot.slane %v815, %v819
        %v826 = vunpack.c.l.b16 %v811
        %v827 = vunpack.c.l.b16 %v812
        %v828 = vunpack.c.l.b16 %v813
        %v829 = vunpack.c.l.b16 %v814
        %v830 = vpack.c.b16 %v827, %v826
        %v831 = vpack.c.b16 %v829, %v828
        %v835 = vsel %vm781, %v810, 0
        %837 = vmatprep.subr.bf16.mxu0 0
        %838 = vmatpush1.bf16.msra.mxu0 %v830
        %839 = vmatprep.subr.bf16.mxu0 0
        %840 = vmatpush1.bf16.msra.mxu0 %v831
        %841 = vmatprep.subr.bf16.mxu0 0
        %842 = vmatpush1.bf16.msra.mxu0 0
        %843 = vmatprep.subr.bf16.mxu0 0
        %844 = vmatpush1.bf16.msra.mxu0 0
        %845 = vmatprep.subr.bf16.mxu0 0
        %846 = vmatpush1.bf16.msra.mxu0 0
        %847 = vmatprep.subr.bf16.mxu0 0
        %848 = vmatpush1.bf16.msra.mxu0 0
        %849 = vmatprep.subr.bf16.mxu0 0
        %850 = vmatpush1.bf16.msra.mxu0 0
        %851 = vmatprep.subr.bf16.mxu0 0
        %852 = vmatpush1.bf16.msra.mxu0 0
        %853 = vmatprep.subr.bf16.mxu0 0
        %854 = vmatpush1.bf16.msra.mxu0 0
        %855 = vmatprep.subr.bf16.mxu0 0
        %856 = vmatpush1.bf16.msra.mxu0 0
        %857 = vmatprep.subr.bf16.mxu0 0
        %858 = vmatpush1.bf16.msra.mxu0 0
        %859 = vmatprep.subr.bf16.mxu0 0
        %860 = vmatpush1.bf16.msra.mxu0 0
        %861 = vmatprep.subr.bf16.mxu0 0
        %862 = vmatpush1.bf16.msra.mxu0 0
        %863 = vmatprep.subr.bf16.mxu0 0
        %864 = vmatpush1.bf16.msra.mxu0 0
        %865 = vmatprep.subr.bf16.mxu0 0
        %866 = vmatpush1.bf16.msra.mxu0 0
        %867 = vmatprep.subr.bf16.mxu0 0
        %868 = vmatpush1.bf16.msra.mxu0 0
        %869 = vmatprep.mubr.bf16.mxu0 0
        %870 = vmatmul.mubr.bf16.gmra.mrb[0].mxu0 %v835
        %v871 = vpop.f32.mrb[0].mxu0
        %v872 = vadd.f32 %v820, %v871
        %v873 = vpop.f32.mrb[0].mxu0
        %v874 = vpop.f32.mrb[0].mxu0
        %v875 = vpop.f32.mrb[0].mxu0
        %876 = vdwg.mxu0
        %878 = vrot.lane.b32.xlu0 %v872, 112
        %v879 = vpop.permute.xlu0 %878
        %v881 = vcombine.high %v872, 0.0
        %v883 = vunpack.c.l.s4 1983009808
        %v884 = vunpack.c.0.s8 %v883
        %v885 = vlaneseq
        %v886 = vshrl.u32 %v885, 7
        %v887 = vsub.s32 %v884, %v886
        %v888 = vrot.slane %v872, %v887
        %v890 = vunpack.c.l.s4 1983009808
        %v891 = vunpack.c.0.s8 %v890
        %v892 = vlaneseq
        %v893 = vshrl.u32 %v892, 7
        %v894 = vsub.s32 %v891, %v893
        %v895 = vrot.slane %v881, %v894
        %v896 = vcombine.high %v879, 0.0
        %v898 = vunpack.c.l.s4 1983009808
        %v899 = vunpack.c.0.s8 %v898
        %v900 = vlaneseq
        %v901 = vshrl.u32 %v900, 7
        %v902 = vsub.s32 %v899, %v901
        %v903 = vrot.slane %v879, %v902
        %v905 = vunpack.c.l.s4 1983009808
        %v906 = vunpack.c.0.s8 %v905
        %v907 = vlaneseq
        %v908 = vshrl.u32 %v907, 7
        %v909 = vsub.s32 %v906, %v908
        %v910 = vrot.slane %v896, %v909
        %v911 = vcombine.low %v888, %v903
        %v912 = vcombine.high %v888, %v903
        %v914 = vunpack.c.l.s4 1934713408
        %v915 = vunpack.c.0.s8 %v914
        %v916 = vlaneseq
        %v917 = vshrl.u32 %v916, 7
        %v918 = vsub.s32 %v915, %v917
        %v919 = vrot.slane %v911, %v918
        %v921 = vunpack.c.l.s4 1934713408
        %v922 = vunpack.c.0.s8 %v921
        %v923 = vlaneseq
        %v924 = vshrl.u32 %v923, 7
        %v925 = vsub.s32 %v922, %v924
        %v926 = vrot.slane %v912, %v925
        %v927 = vcombine.low %v895, %v910
        %v928 = vcombine.high %v895, %v910
        %v930 = vunpack.c.l.s4 1934713408
        %v931 = vunpack.c.0.s8 %v930
        %v932 = vlaneseq
        %v933 = vshrl.u32 %v932, 7
        %v934 = vsub.s32 %v931, %v933
        %v935 = vrot.slane %v927, %v934
        %v937 = vunpack.c.l.s4 1934713408
        %v938 = vunpack.c.0.s8 %v937
        %v939 = vlaneseq
        %v940 = vshrl.u32 %v939, 7
        %v941 = vsub.s32 %v938, %v940
        %v942 = vrot.slane %v928, %v941
        %v943 = vcombine.high %v919, 0.0
        %v944 = vcombine.high %v926, 0.0
        %v945 = vcombine.high %v935, 0.0
        %v946 = vcombine.high %v942, 0.0
        %v947 = vcombine.low %v919, %v926
        %v949 = vunpack.c.l.s4 1983009808
        %v950 = vunpack.c.0.s8 %v949
        %v951 = vlaneseq
        %v952 = vshrl.u32 %v951, 7
        %v953 = vsub.s32 %v950, %v952
        %v954 = vrot.slane %v947, %v953
        %v955 = vcombine.low %v943, %v944
        %v957 = vunpack.c.l.s4 1983009808
        %v958 = vunpack.c.0.s8 %v957
        %v959 = vlaneseq
        %v960 = vshrl.u32 %v959, 7
        %v961 = vsub.s32 %v958, %v960
        %v962 = vrot.slane %v955, %v961
        %v963 = vcombine.low %v935, %v942
        %v965 = vunpack.c.l.s4 1983009808
        %v966 = vunpack.c.0.s8 %v965
        %v967 = vlaneseq
        %v968 = vshrl.u32 %v967, 7
        %v969 = vsub.s32 %v966, %v968
        %v970 = vrot.slane %v963, %v969
        %v971 = vcombine.low %v945, %v946
        %v973 = vunpack.c.l.s4 1983009808
        %v974 = vunpack.c.0.s8 %v973
        %v975 = vlaneseq
        %v976 = vshrl.u32 %v975, 7
        %v977 = vsub.s32 %v974, %v976
        %v978 = vrot.slane %v971, %v977
        %v979 = vcombine.low %v954, %v962
        %v981 = vunpack.c.l.s4 1934713408
        %v982 = vunpack.c.0.s8 %v981
        %v983 = vlaneseq
        %v984 = vshrl.u32 %v983, 7
        %v985 = vsub.s32 %v982, %v984
        %v986 = vrot.slane %v979, %v985
        %v987 = vcombine.low %v970, %v978
        %v989 = vunpack.c.l.s4 1934713408
        %v990 = vunpack.c.0.s8 %v989
        %v991 = vlaneseq
        %v992 = vshrl.u32 %v991, 7
        %v993 = vsub.s32 %v990, %v992
        %v994 = vrot.slane %v987, %v993
        %v995 = vcombine.low %v986, %v994
        %v996 = vcombine.high %v986, %v994
        %v997 = vpack.c.bf16 %v995, %v995
        %v998 = vpack.c.bf16 %v996, %v996
        %999 = vrot.lane.b32.xlu0 %v872, 96
        %v1000 = vpop.permute.xlu0 %999
        %1001 = vrot.lane.b32.xlu0 %v879, 96
        %v1002 = vpop.permute.xlu0 %1001
        %v1005 = vcombine.high %v1000, 0.0
        %v1007 = vunpack.c.l.s4 1983009808
        %v1008 = vunpack.c.0.s8 %v1007
        %v1009 = vlaneseq
        %v1010 = vshrl.u32 %v1009, 7
        %v1011 = vsub.s32 %v1008, %v1010
        %v1012 = vrot.slane %v1000, %v1011
        %v1014 = vunpack.c.l.s4 1983009808
        %v1015 = vunpack.c.0.s8 %v1014
        %v1016 = vlaneseq
        %v1017 = vshrl.u32 %v1016, 7
        %v1018 = vsub.s32 %v1015, %v1017
        %v1019 = vrot.slane %v1005, %v1018
        %v1020 = vcombine.high %v1002, 0.0
        %v1022 = vunpack.c.l.s4 1983009808
        %v1023 = vunpack.c.0.s8 %v1022
        %v1024 = vlaneseq
        %v1025 = vshrl.u32 %v1024, 7
        %v1026 = vsub.s32 %v1023, %v1025
        %v1027 = vrot.slane %v1002, %v1026
        %v1029 = vunpack.c.l.s4 1983009808
        %v1030 = vunpack.c.0.s8 %v1029
        %v1031 = vlaneseq
        %v1032 = vshrl.u32 %v1031, 7
        %v1033 = vsub.s32 %v1030, %v1032
        %v1034 = vrot.slane %v1020, %v1033
        %v1035 = vcombine.low %v1012, %v1027
        %v1036 = vcombine.high %v1012, %v1027
        %v1038 = vunpack.c.l.s4 1934713408
        %v1039 = vunpack.c.0.s8 %v1038
        %v1040 = vlaneseq
        %v1041 = vshrl.u32 %v1040, 7
        %v1042 = vsub.s32 %v1039, %v1041
        %v1043 = vrot.slane %v1035, %v1042
        %v1045 = vunpack.c.l.s4 1934713408
        %v1046 = vunpack.c.0.s8 %v1045
        %v1047 = vlaneseq
        %v1048 = vshrl.u32 %v1047, 7
        %v1049 = vsub.s32 %v1046, %v1048
        %v1050 = vrot.slane %v1036, %v1049
        %v1051 = vcombine.low %v1019, %v1034
        %v1052 = vcombine.high %v1019, %v1034
        %v1054 = vunpack.c.l.s4 1934713408
        %v1055 = vunpack.c.0.s8 %v1054
        %v1056 = vlaneseq
        %v1057 = vshrl.u32 %v1056, 7
        %v1058 = vsub.s32 %v1055, %v1057
        %v1059 = vrot.slane %v1051, %v1058
        %v1061 = vunpack.c.l.s4 1934713408
        %v1062 = vunpack.c.0.s8 %v1061
        %v1063 = vlaneseq
        %v1064 = vshrl.u32 %v1063, 7
        %v1065 = vsub.s32 %v1062, %v1064
        %v1066 = vrot.slane %v1052, %v1065
        %v1067 = vcombine.high %v1043, 0.0
        %v1068 = vcombine.high %v1050, 0.0
        %v1069 = vcombine.high %v1059, 0.0
        %v1070 = vcombine.high %v1066, 0.0
        %v1071 = vcombine.low %v1043, %v1050
        %v1073 = vunpack.c.l.s4 1983009808
        %v1074 = vunpack.c.0.s8 %v1073
        %v1075 = vlaneseq
        %v1076 = vshrl.u32 %v1075, 7
        %v1077 = vsub.s32 %v1074, %v1076
        %v1078 = vrot.slane %v1071, %v1077
        %v1079 = vcombine.low %v1067, %v1068
        %v1081 = vunpack.c.l.s4 1983009808
        %v1082 = vunpack.c.0.s8 %v1081
        %v1083 = vlaneseq
        %v1084 = vshrl.u32 %v1083, 7
        %v1085 = vsub.s32 %v1082, %v1084
        %v1086 = vrot.slane %v1079, %v1085
        %v1087 = vcombine.low %v1059, %v1066
        %v1089 = vunpack.c.l.s4 1983009808
        %v1090 = vunpack.c.0.s8 %v1089
        %v1091 = vlaneseq
        %v1092 = vshrl.u32 %v1091, 7
        %v1093 = vsub.s32 %v1090, %v1092
        %v1094 = vrot.slane %v1087, %v1093
        %v1095 = vcombine.low %v1069, %v1070
        %v1097 = vunpack.c.l.s4 1983009808
        %v1098 = vunpack.c.0.s8 %v1097
        %v1099 = vlaneseq
        %v1100 = vshrl.u32 %v1099, 7
        %v1101 = vsub.s32 %v1098, %v1100
        %v1102 = vrot.slane %v1095, %v1101
        %v1103 = vcombine.low %v1078, %v1086
        %v1105 = vunpack.c.l.s4 1934713408
        %v1106 = vunpack.c.0.s8 %v1105
        %v1107 = vlaneseq
        %v1108 = vshrl.u32 %v1107, 7
        %v1109 = vsub.s32 %v1106, %v1108
        %v1110 = vrot.slane %v1103, %v1109
        %v1111 = vcombine.low %v1094, %v1102
        %v1113 = vunpack.c.l.s4 1934713408
        %v1114 = vunpack.c.0.s8 %v1113
        %v1115 = vlaneseq
        %v1116 = vshrl.u32 %v1115, 7
        %v1117 = vsub.s32 %v1114, %v1116
        %v1118 = vrot.slane %v1111, %v1117
        %v1119 = vcombine.low %v1110, %v1118
        %v1120 = vcombine.high %v1110, %v1118
        %v1121 = vpack.c.bf16 %v1119, %v1119
        %v1122 = vpack.c.bf16 %v1120, %v1120
        %1123 = vrot.lane.b32.xlu0 %v872, 64
        %v1124 = vpop.permute.xlu0 %1123
        %1125 = vrot.lane.b32.xlu0 %v879, 64
        %v1126 = vpop.permute.xlu0 %1125
        %v1129 = vcombine.high %v1124, 0.0
        %v1131 = vunpack.c.l.s4 1983009808
        %v1132 = vunpack.c.0.s8 %v1131
        %v1133 = vlaneseq
        %v1134 = vshrl.u32 %v1133, 7
        %v1135 = vsub.s32 %v1132, %v1134
        %v1136 = vrot.slane %v1124, %v1135
        %v1138 = vunpack.c.l.s4 1983009808
        %v1139 = vunpack.c.0.s8 %v1138
        %v1140 = vlaneseq
        %v1141 = vshrl.u32 %v1140, 7
        %v1142 = vsub.s32 %v1139, %v1141
        %v1143 = vrot.slane %v1129, %v1142
        %v1144 = vcombine.high %v1126, 0.0
        %v1146 = vunpack.c.l.s4 1983009808
        %v1147 = vunpack.c.0.s8 %v1146
        %v1148 = vlaneseq
        %v1149 = vshrl.u32 %v1148, 7
        %v1150 = vsub.s32 %v1147, %v1149
        %v1151 = vrot.slane %v1126, %v1150
        %v1153 = vunpack.c.l.s4 1983009808
        %v1154 = vunpack.c.0.s8 %v1153
        %v1155 = vlaneseq
        %v1156 = vshrl.u32 %v1155, 7
        %v1157 = vsub.s32 %v1154, %v1156
        %v1158 = vrot.slane %v1144, %v1157
        %v1159 = vcombine.low %v1136, %v1151
        %v1160 = vcombine.high %v1136, %v1151
        %v1162 = vunpack.c.l.s4 1934713408
        %v1163 = vunpack.c.0.s8 %v1162
        %v1164 = vlaneseq
        %v1165 = vshrl.u32 %v1164, 7
        %v1166 = vsub.s32 %v1163, %v1165
        %v1167 = vrot.slane %v1159, %v1166
        %v1169 = vunpack.c.l.s4 1934713408
        %v1170 = vunpack.c.0.s8 %v1169
        %v1171 = vlaneseq
        %v1172 = vshrl.u32 %v1171, 7
        %v1173 = vsub.s32 %v1170, %v1172
        %v1174 = vrot.slane %v1160, %v1173
        %v1175 = vcombine.low %v1143, %v1158
        %v1176 = vcombine.high %v1143, %v1158
        %v1178 = vunpack.c.l.s4 1934713408
        %v1179 = vunpack.c.0.s8 %v1178
        %v1180 = vlaneseq
        %v1181 = vshrl.u32 %v1180, 7
        %v1182 = vsub.s32 %v1179, %v1181
        %v1183 = vrot.slane %v1175, %v1182
        %v1185 = vunpack.c.l.s4 1934713408
        %v1186 = vunpack.c.0.s8 %v1185
        %v1187 = vlaneseq
        %v1188 = vshrl.u32 %v1187, 7
        %v1189 = vsub.s32 %v1186, %v1188
        %v1190 = vrot.slane %v1176, %v1189
        %v1191 = vcombine.high %v1167, 0.0
        %v1192 = vcombine.high %v1174, 0.0
        %v1193 = vcombine.high %v1183, 0.0
        %v1194 = vcombine.high %v1190, 0.0
        %v1195 = vcombine.low %v1167, %v1174
        %v1197 = vunpack.c.l.s4 1983009808
        %v1198 = vunpack.c.0.s8 %v1197
        %v1199 = vlaneseq
        %v1200 = vshrl.u32 %v1199, 7
        %v1201 = vsub.s32 %v1198, %v1200
        %v1202 = vrot.slane %v1195, %v1201
        %v1203 = vcombine.low %v1191, %v1192
        %v1205 = vunpack.c.l.s4 1983009808
        %v1206 = vunpack.c.0.s8 %v1205
        %v1207 = vlaneseq
        %v1208 = vshrl.u32 %v1207, 7
        %v1209 = vsub.s32 %v1206, %v1208
        %v1210 = vrot.slane %v1203, %v1209
        %v1211 = vcombine.low %v1183, %v1190
        %v1213 = vunpack.c.l.s4 1983009808
        %v1214 = vunpack.c.0.s8 %v1213
        %v1215 = vlaneseq
        %v1216 = vshrl.u32 %v1215, 7
        %v1217 = vsub.s32 %v1214, %v1216
        %v1218 = vrot.slane %v1211, %v1217
        %v1219 = vcombine.low %v1193, %v1194
        %v1221 = vunpack.c.l.s4 1983009808
        %v1222 = vunpack.c.0.s8 %v1221
        %v1223 = vlaneseq
        %v1224 = vshrl.u32 %v1223, 7
        %v1225 = vsub.s32 %v1222, %v1224
        %v1226 = vrot.slane %v1219, %v1225
        %v1227 = vcombine.low %v1202, %v1210
        %v1229 = vunpack.c.l.s4 1934713408
        %v1230 = vunpack.c.0.s8 %v1229
        %v1231 = vlaneseq
        %v1232 = vshrl.u32 %v1231, 7
        %v1233 = vsub.s32 %v1230, %v1232
        %v1234 = vrot.slane %v1227, %v1233
        %v1235 = vcombine.low %v1218, %v1226
        %v1237 = vunpack.c.l.s4 1934713408
        %v1238 = vunpack.c.0.s8 %v1237
        %v1239 = vlaneseq
        %v1240 = vshrl.u32 %v1239, 7
        %v1241 = vsub.s32 %v1238, %v1240
        %v1242 = vrot.slane %v1235, %v1241
        %v1243 = vcombine.low %v1234, %v1242
        %v1244 = vcombine.high %v1234, %v1242
        %v1245 = vpack.c.bf16 %v1243, %v1243
        %v1246 = vpack.c.bf16 %v1244, %v1244
        %vm1247 = vcmask 130048
        %v1249 = vsel %vm1247, %v997, 0
        %v1252 = vsel %vm1247, %v1121, 0
        %1254 = vmatprep.subr.bf16.mxu0 0
        %1255 = vmatpush1.bf16.xpose.msra.mxu0 %v1252
        %1256 = vmatprep.subr.bf16.mxu0 0
        %1257 = vmatpush1.bf16.xpose.msra.mxu0 0
        %1258 = vmatprep.subr.bf16.mxu0 0
        %1259 = vmatpush1.bf16.xpose.msra.mxu0 0
        %1260 = vmatprep.subr.bf16.mxu0 0
        %1261 = vmatpush1.bf16.xpose.msra.mxu0 0
        %1262 = vmatprep.subr.bf16.mxu0 0
        %1263 = vmatpush1.bf16.xpose.msra.mxu0 0
        %1264 = vmatprep.subr.bf16.mxu0 0
        %1265 = vmatpush1.bf16.xpose.msra.mxu0 0
        %1266 = vmatprep.subr.bf16.mxu0 0
        %1267 = vmatpush1.bf16.xpose.msra.mxu0 0
        %1268 = vmatprep.subr.bf16.mxu0 0
        %1269 = vmatpush1.bf16.xpose.msra.mxu0 0
        %1270 = vmatprep.subr.bf16.mxu0 0
        %1271 = vmatpush1.bf16.xpose.msra.mxu0 0
        %1272 = vmatprep.subr.bf16.mxu0 0
        %1273 = vmatpush1.bf16.xpose.msra.mxu0 0
        %1274 = vmatprep.subr.bf16.mxu0 0
        %1275 = vmatpush1.bf16.xpose.msra.mxu0 0
        %1276 = vmatprep.subr.bf16.mxu0 0
        %1277 = vmatpush1.bf16.xpose.msra.mxu0 0
        %1278 = vmatprep.subr.bf16.mxu0 0
        %1279 = vmatpush1.bf16.xpose.msra.mxu0 0
        %1280 = vmatprep.subr.bf16.mxu0 0
        %1281 = vmatpush1.bf16.xpose.msra.mxu0 0
        %1282 = vmatprep.subr.bf16.mxu0 0
        %1283 = vmatpush1.bf16.xpose.msra.mxu0 0
        %1284 = vmatprep.subr.bf16.mxu0 0
        %1285 = vmatpush1.bf16.xpose.msra.mxu0 0
        %1286 = vmatprep.mubr.bf16.mxu0 0
        %1287 = vmatmul.mubr.bf16.gmra.mrb[0].mxu0 %v1249
        %v1288 = vpop.f32.mrb[0].mxu0
        %v1289 = vadd.f32 0.0, %v1288
        %v1290 = vpop.f32.mrb[0].mxu0
        %v1291 = vpop.f32.mrb[0].mxu0
        %v1292 = vpop.f32.mrb[0].mxu0
        %1293 = vdwg.mxu0
        %v1295 = vsel %vm1247, %v998, 0
        %v1298 = vsel %vm1247, %v1122, 0
        %1300 = vmatprep.subr.bf16.mxu0 0
        %1301 = vmatpush1.bf16.xpose.msra.mxu0 %v1298
        %1302 = vmatprep.subr.bf16.mxu0 0
        %1303 = vmatpush1.bf16.xpose.msra.mxu0 0
        %1304 = vmatprep.subr.bf16.mxu0 0
        %1305 = vmatpush1.bf16.xpose.msra.mxu0 0
        %1306 = vmatprep.subr.bf16.mxu0 0
        %1307 = vmatpush1.bf16.xpose.msra.mxu0 0
        %1308 = vmatprep.subr.bf16.mxu0 0
        %1309 = vmatpush1.bf16.xpose.msra.mxu0 0
        %1310 = vmatprep.subr.bf16.mxu0 0
        %1311 = vmatpush1.bf16.xpose.msra.mxu0 0
        %1312 = vmatprep.subr.bf16.mxu0 0
        %1313 = vmatpush1.bf16.xpose.msra.mxu0 0
        %1314 = vmatprep.subr.bf16.mxu0 0
        %1315 = vmatpush1.bf16.xpose.msra.mxu0 0
        %1316 = vmatprep.subr.bf16.mxu0 0
        %1317 = vmatpush1.bf16.xpose.msra.mxu0 0
        %1318 = vmatprep.subr.bf16.mxu0 0
        %1319 = vmatpush1.bf16.xpose.msra.mxu0 0
        %1320 = vmatprep.subr.bf16.mxu0 0
        %1321 = vmatpush1.bf16.xpose.msra.mxu0 0
        %1322 = vmatprep.subr.bf16.mxu0 0
        %1323 = vmatpush1.bf16.xpose.msra.mxu0 0
        %1324 = vmatprep.subr.bf16.mxu0 0
        %1325 = vmatpush1.bf16.xpose.msra.mxu0 0
        %1326 = vmatprep.subr.bf16.mxu0 0
        %1327 = vmatpush1.bf16.xpose.msra.mxu0 0
        %1328 = vmatprep.subr.bf16.mxu0 0
        %1329 = vmatpush1.bf16.xpose.msra.mxu0 0
        %1330 = vmatprep.subr.bf16.mxu0 0
        %1331 = vmatpush1.bf16.xpose.msra.mxu0 0
        %1332 = vmatprep.mubr.bf16.mxu0 0
        %1333 = vmatmul.mubr.bf16.gmra.mrb[0].mxu0 %v1295
        %v1334 = vpop.f32.mrb[0].mxu0
        %v1335 = vadd.f32 0.0, %v1334
        %v1336 = vpop.f32.mrb[0].mxu0
        %v1337 = vpop.f32.mrb[0].mxu0
        %v1338 = vpop.f32.mrb[0].mxu0
        %1339 = vdwg.mxu0
        %v1340 = vmul.f32 %v1289, 0.25
        %v1341 = vmul.f32 %v1335, 0.25
        %v1342 = vlaneseq
        %v1343 = vshrl.u32 %v1342, 7
        %v1344 = vlaneseq
        %v1345 = vand.u32 %v1344, 127
        %vm1346 = vcmp.ge.s32.totalorder %v1343, %v1345
        %v1347 = vsel %vm1346, 1, 0
        %vm1348 = vcmp.eq.s32.totalorder %v1347, 1
        %v1349 = vsel %vm1348, %v1340, -1e+30
        %v1350 = vsel %vm1348, %v1341, -1e+30
        %vm1351 = vcmask 64512
        %v1352 = vsel %vm1351, %v1349, -inf
        %1353 = vmax.xlane.f32.xlu0 %v1352
        %v1354 = vpop.xlane.xlu0 %1353
        %v1355 = vsel %vm1351, %v1350, -inf
        %1356 = vmax.xlane.f32.xlu0 %v1355
        %v1357 = vpop.xlane.xlu0 %1356
        %v1358 = vsub.f32 %v1349, %v1354
        %v1359 = vsub.f32 %v1350, %v1357
        %v1360 = vmul.f32 %v1358, 1.442695
        %v1361 = vpow.pop %v1360
        %v1362 = vmul.f32 %v1359, 1.442695
        %v1363 = vpow.pop %v1362
        %v1364 = vsel %vm1351, %v1361, 0.0
        %1365 = vadd.xlane.f32.xlu0 %v1364
        %v1366 = vpop.xlane.xlu0 %1365
        %v1367 = vsel %vm1351, %v1363, 0.0
        %1368 = vadd.xlane.f32.xlu0 %v1367
        %v1369 = vpop.xlane.xlu0 %1368
        %v1370 = vrcp.pop %v1366
        %v1371 = vrcp.pop %v1369
        %v1372 = vmul.f32 %v1361, %v1370
        %v1373 = vmul.f32 %v1363, %v1371
        %v1374 = vpack.c.bf16 %v1372, %v1372
        %v1375 = vpack.c.bf16 %v1373, %v1373
        %1376 = vxpose.xlu0.c.b16.start [1/8] %v1245, 128
        %1377 = vxpose.xlu0.c.b16.cont [2/8] 0, 128
        %1378 = vxpose.xlu0.c.b16.cont [3/8] 0, 128
        %1379 = vxpose.xlu0.c.b16.cont [4/8] 0, 128
        %1380 = vxpose.xlu0.c.b16.cont [5/8] 0, 128
        %1381 = vxpose.xlu0.c.b16.cont [6/8] 0, 128
        %1382 = vxpose.xlu0.c.b16.cont [7/8] 0, 128
        %1383 = vxpose.xlu0.c.b16.end [8/8] 0, 128
        %v1384 = vpop.trf.xlu0
        %v1385 = vpop.trf.xlu0
        %v1386 = vpop.trf.xlu0
        %v1387 = vpop.trf.xlu0
        %v1388 = vpop.trf.xlu0
        %v1389 = vpop.trf.xlu0
        %v1390 = vpop.trf.xlu0
        %v1391 = vpop.trf.xlu0
        %v1393 = vsel %vm1351, %v1384, 0
        %v1396 = vsel %vm1351, %v1374, 0
        %1398 = vmatprep.subr.bf16.mxu0 0
        %1399 = vmatpush1.bf16.xpose.msra.mxu0 %v1396
        %1400 = vmatprep.subr.bf16.mxu0 0
        %1401 = vmatpush1.bf16.xpose.msra.mxu0 0
        %1402 = vmatprep.subr.bf16.mxu0 0
        %1403 = vmatpush1.bf16.xpose.msra.mxu0 0
        %1404 = vmatprep.subr.bf16.mxu0 0
        %1405 = vmatpush1.bf16.xpose.msra.mxu0 0
        %1406 = vmatprep.subr.bf16.mxu0 0
        %1407 = vmatpush1.bf16.xpose.msra.mxu0 0
        %1408 = vmatprep.subr.bf16.mxu0 0
        %1409 = vmatpush1.bf16.xpose.msra.mxu0 0
        %1410 = vmatprep.subr.bf16.mxu0 0
        %1411 = vmatpush1.bf16.xpose.msra.mxu0 0
        %1412 = vmatprep.subr.bf16.mxu0 0
        %1413 = vmatpush1.bf16.xpose.msra.mxu0 0
        %1414 = vmatprep.subr.bf16.mxu0 0
        %1415 = vmatpush1.bf16.xpose.msra.mxu0 0
        %1416 = vmatprep.subr.bf16.mxu0 0
        %1417 = vmatpush1.bf16.xpose.msra.mxu0 0
        %1418 = vmatprep.subr.bf16.mxu0 0
        %1419 = vmatpush1.bf16.xpose.msra.mxu0 0
        %1420 = vmatprep.subr.bf16.mxu0 0
        %1421 = vmatpush1.bf16.xpose.msra.mxu0 0
        %1422 = vmatprep.subr.bf16.mxu0 0
        %1423 = vmatpush1.bf16.xpose.msra.mxu0 0
        %1424 = vmatprep.subr.bf16.mxu0 0
        %1425 = vmatpush1.bf16.xpose.msra.mxu0 0
        %1426 = vmatprep.subr.bf16.mxu0 0
        %1427 = vmatpush1.bf16.xpose.msra.mxu0 0
        %1428 = vmatprep.subr.bf16.mxu0 0
        %1429 = vmatpush1.bf16.xpose.msra.mxu0 0
        %1430 = vmatprep.mubr.bf16.mxu0 0
        %1431 = vmatmul.mubr.bf16.gmra.mrb[0].mxu0 %v1393
        %v1432 = vpop.f32.mrb[0].mxu0
        %v1433 = vadd.f32 0.0, %v1432
        %v1434 = vpop.f32.mrb[0].mxu0
        %v1435 = vpop.f32.mrb[0].mxu0
        %v1436 = vadd.f32 0.0, %v1435
        %v1437 = vpop.f32.mrb[0].mxu0
        %1438 = vdwg.mxu0
        %1439 = vxpose.xlu0.c.b16.start [1/8] %v1246, 128
        %1440 = vxpose.xlu0.c.b16.cont [2/8] 0, 128
        %1441 = vxpose.xlu0.c.b16.cont [3/8] 0, 128
        %1442 = vxpose.xlu0.c.b16.cont [4/8] 0, 128
        %1443 = vxpose.xlu0.c.b16.cont [5/8] 0, 128
        %1444 = vxpose.xlu0.c.b16.cont [6/8] 0, 128
        %1445 = vxpose.xlu0.c.b16.cont [7/8] 0, 128
        %1446 = vxpose.xlu0.c.b16.end [8/8] 0, 128
        %v1447 = vpop.trf.xlu0
        %v1448 = vpop.trf.xlu0
        %v1449 = vpop.trf.xlu0
        %v1450 = vpop.trf.xlu0
        %v1451 = vpop.trf.xlu0
        %v1452 = vpop.trf.xlu0
        %v1453 = vpop.trf.xlu0
        %v1454 = vpop.trf.xlu0
        %v1456 = vsel %vm1351, %v1447, 0
        %v1459 = vsel %vm1351, %v1375, 0
        %1461 = vmatprep.subr.bf16.mxu0 0
        %1462 = vmatpush1.bf16.xpose.msra.mxu0 %v1459
        %1463 = vmatprep.subr.bf16.mxu0 0
        %1464 = vmatpush1.bf16.xpose.msra.mxu0 0
        %1465 = vmatprep.subr.bf16.mxu0 0
        %1466 = vmatpush1.bf16.xpose.msra.mxu0 0
        %1467 = vmatprep.subr.bf16.mxu0 0
        %1468 = vmatpush1.bf16.xpose.msra.mxu0 0
        %1469 = vmatprep.subr.bf16.mxu0 0
        %1470 = vmatpush1.bf16.xpose.msra.mxu0 0
        %1471 = vmatprep.subr.bf16.mxu0 0
        %1472 = vmatpush1.bf16.xpose.msra.mxu0 0
        %1473 = vmatprep.subr.bf16.mxu0 0
        %1474 = vmatpush1.bf16.xpose.msra.mxu0 0
        %1475 = vmatprep.subr.bf16.mxu0 0
        %1476 = vmatpush1.bf16.xpose.msra.mxu0 0
        %1477 = vmatprep.subr.bf16.mxu0 0
        %1478 = vmatpush1.bf16.xpose.msra.mxu0 0
        %1479 = vmatprep.subr.bf16.mxu0 0
        %1480 = vmatpush1.bf16.xpose.msra.mxu0 0
        %1481 = vmatprep.subr.bf16.mxu0 0
        %1482 = vmatpush1.bf16.xpose.msra.mxu0 0
        %1483 = vmatprep.subr.bf16.mxu0 0
        %1484 = vmatpush1.bf16.xpose.msra.mxu0 0
        %1485 = vmatprep.subr.bf16.mxu0 0
        %1486 = vmatpush1.bf16.xpose.msra.mxu0 0
        %1487 = vmatprep.subr.bf16.mxu0 0
        %1488 = vmatpush1.bf16.xpose.msra.mxu0 0
        %1489 = vmatprep.subr.bf16.mxu0 0
        %1490 = vmatpush1.bf16.xpose.msra.mxu0 0
        %1491 = vmatprep.subr.bf16.mxu0 0
        %1492 = vmatpush1.bf16.xpose.msra.mxu0 0
        %1493 = vmatprep.mubr.bf16.mxu0 0
        %1494 = vmatmul.mubr.bf16.gmra.mrb[0].mxu0 %v1456
        %v1495 = vpop.f32.mrb[0].mxu0
        %v1496 = vadd.f32 0.0, %v1495
        %v1497 = vpop.f32.mrb[0].mxu0
        %v1498 = vpop.f32.mrb[0].mxu0
        %v1499 = vadd.f32 0.0, %v1498
        %v1500 = vpop.f32.mrb[0].mxu0
        %1501 = vdwg.mxu0
        %1502 = vxpose.xlu0.b32.start [1/16] %v1433, 128
        %1503 = vxpose.xlu0.b32.cont [2/16] %v1436, 128
        %1504 = vxpose.xlu0.b32.cont [3/16] 0.0, 128
        %1505 = vxpose.xlu0.b32.cont [4/16] 0.0, 128
        %1506 = vxpose.xlu0.b32.cont [5/16] 0.0, 128
        %1507 = vxpose.xlu0.b32.cont [6/16] 0.0, 128
        %1508 = vxpose.xlu0.b32.cont [7/16] 0.0, 128
        %1509 = vxpose.xlu0.b32.cont [8/16] 0.0, 128
        %1510 = vxpose.xlu0.b32.cont [9/16] 0.0, 128
        %1511 = vxpose.xlu0.b32.cont [10/16] 0.0, 128
        %1512 = vxpose.xlu0.b32.cont [11/16] 0.0, 128
        %1513 = vxpose.xlu0.b32.cont [12/16] 0.0, 128
        %1514 = vxpose.xlu0.b32.cont [13/16] 0.0, 128
        %1515 = vxpose.xlu0.b32.cont [14/16] 0.0, 128
        %1516 = vxpose.xlu0.b32.cont [15/16] 0.0, 128
        %1517 = vxpose.xlu0.b32.end [16/16] 0.0, 128
        %v1518 = vpop.trf.xlu0
        %v1519 = vpop.trf.xlu0
        %v1520 = vpop.trf.xlu0
        %v1521 = vpop.trf.xlu0
        %v1522 = vpop.trf.xlu0
        %v1523 = vpop.trf.xlu0
        %v1524 = vpop.trf.xlu0
        %v1525 = vpop.trf.xlu0
        %v1526 = vpop.trf.xlu0
        %v1527 = vpop.trf.xlu0
        %v1528 = vpop.trf.xlu0
        %v1529 = vpop.trf.xlu0
        %v1530 = vpop.trf.xlu0
        %v1531 = vpop.trf.xlu0
        %v1532 = vpop.trf.xlu0
        %v1533 = vpop.trf.xlu0
        %1534 = vxpose.xlu0.b32.start [1/16] %v1496, 128
        %1535 = vxpose.xlu0.b32.cont [2/16] %v1499, 128
        %1536 = vxpose.xlu0.b32.cont [3/16] 0.0, 128
        %1537 = vxpose.xlu0.b32.cont [4/16] 0.0, 128
        %1538 = vxpose.xlu0.b32.cont [5/16] 0.0, 128
        %1539 = vxpose.xlu0.b32.cont [6/16] 0.0, 128
        %1540 = vxpose.xlu0.b32.cont [7/16] 0.0, 128
        %1541 = vxpose.xlu0.b32.cont [8/16] 0.0, 128
        %1542 = vxpose.xlu0.b32.cont [9/16] 0.0, 128
        %1543 = vxpose.xlu0.b32.cont [10/16] 0.0, 128
        %1544 = vxpose.xlu0.b32.cont [11/16] 0.0, 128
        %1545 = vxpose.xlu0.b32.cont [12/16] 0.0, 128
        %1546 = vxpose.xlu0.b32.cont [13/16] 0.0, 128
        %1547 = vxpose.xlu0.b32.cont [14/16] 0.0, 128
        %1548 = vxpose.xlu0.b32.cont [15/16] 0.0, 128
        %1549 = vxpose.xlu0.b32.end [16/16] 0.0, 128
        %v1550 = vpop.trf.xlu0
        %v1551 = vpop.trf.xlu0
        %v1552 = vpop.trf.xlu0
        %v1553 = vpop.trf.xlu0
        %v1554 = vpop.trf.xlu0
        %v1555 = vpop.trf.xlu0
        %v1556 = vpop.trf.xlu0
        %v1557 = vpop.trf.xlu0
        %v1558 = vpop.trf.xlu0
        %v1559 = vpop.trf.xlu0
        %v1560 = vpop.trf.xlu0
        %v1561 = vpop.trf.xlu0
        %v1562 = vpop.trf.xlu0
        %v1563 = vpop.trf.xlu0
        %v1564 = vpop.trf.xlu0
        %v1565 = vpop.trf.xlu0
        %v1566 = vcombine.high %v1518, 0.0
        %v1568 = vunpack.c.l.s4 1983009808
        %v1569 = vunpack.c.0.s8 %v1568
        %v1570 = vlaneseq
        %v1571 = vshrl.u32 %v1570, 7
        %v1572 = vsub.s32 %v1569, %v1571
        %v1573 = vrot.slane %v1518, %v1572
        %v1575 = vunpack.c.l.s4 1983009808
        %v1576 = vunpack.c.0.s8 %v1575
        %v1577 = vlaneseq
        %v1578 = vshrl.u32 %v1577, 7
        %v1579 = vsub.s32 %v1576, %v1578
        %v1580 = vrot.slane %v1566, %v1579
        %v1581 = vcombine.high %v1550, 0.0
        %v1583 = vunpack.c.l.s4 1983009808
        %v1584 = vunpack.c.0.s8 %v1583
        %v1585 = vlaneseq
        %v1586 = vshrl.u32 %v1585, 7
        %v1587 = vsub.s32 %v1584, %v1586
        %v1588 = vrot.slane %v1550, %v1587
        %v1590 = vunpack.c.l.s4 1983009808
        %v1591 = vunpack.c.0.s8 %v1590
        %v1592 = vlaneseq
        %v1593 = vshrl.u32 %v1592, 7
        %v1594 = vsub.s32 %v1591, %v1593
        %v1595 = vrot.slane %v1581, %v1594
        %v1596 = vcombine.low %v1573, %v1588
        %v1597 = vcombine.high %v1573, %v1588
        %v1599 = vunpack.c.l.s4 1934713408
        %v1600 = vunpack.c.0.s8 %v1599
        %v1601 = vlaneseq
        %v1602 = vshrl.u32 %v1601, 7
        %v1603 = vsub.s32 %v1600, %v1602
        %v1604 = vrot.slane %v1596, %v1603
        %v1606 = vunpack.c.l.s4 1934713408
        %v1607 = vunpack.c.0.s8 %v1606
        %v1608 = vlaneseq
        %v1609 = vshrl.u32 %v1608, 7
        %v1610 = vsub.s32 %v1607, %v1609
        %v1611 = vrot.slane %v1597, %v1610
        %v1612 = vcombine.low %v1580, %v1595
        %v1613 = vcombine.high %v1580, %v1595
        %v1615 = vunpack.c.l.s4 1934713408
        %v1616 = vunpack.c.0.s8 %v1615
        %v1617 = vlaneseq
        %v1618 = vshrl.u32 %v1617, 7
        %v1619 = vsub.s32 %v1616, %v1618
        %v1620 = vrot.slane %v1612, %v1619
        %v1622 = vunpack.c.l.s4 1934713408
        %v1623 = vunpack.c.0.s8 %v1622
        %v1624 = vlaneseq
        %v1625 = vshrl.u32 %v1624, 7
        %v1626 = vsub.s32 %v1623, %v1625
        %v1627 = vrot.slane %v1613, %v1626
        %v1628 = vcombine.high %v1604, 0.0
        %v1629 = vcombine.high %v1611, 0.0
        %v1630 = vcombine.high %v1620, 0.0
        %v1631 = vcombine.high %v1627, 0.0
        %v1632 = vcombine.low %v1604, %v1611
        %v1634 = vunpack.c.l.s4 1983009808
        %v1635 = vunpack.c.0.s8 %v1634
        %v1636 = vlaneseq
        %v1637 = vshrl.u32 %v1636, 7
        %v1638 = vsub.s32 %v1635, %v1637
        %v1639 = vrot.slane %v1632, %v1638
        %v1640 = vcombine.low %v1628, %v1629
        %v1642 = vunpack.c.l.s4 1983009808
        %v1643 = vunpack.c.0.s8 %v1642
        %v1644 = vlaneseq
        %v1645 = vshrl.u32 %v1644, 7
        %v1646 = vsub.s32 %v1643, %v1645
        %v1647 = vrot.slane %v1640, %v1646
        %v1648 = vcombine.low %v1620, %v1627
        %v1650 = vunpack.c.l.s4 1983009808
        %v1651 = vunpack.c.0.s8 %v1650
        %v1652 = vlaneseq
        %v1653 = vshrl.u32 %v1652, 7
        %v1654 = vsub.s32 %v1651, %v1653
        %v1655 = vrot.slane %v1648, %v1654
        %v1656 = vcombine.low %v1630, %v1631
        %v1658 = vunpack.c.l.s4 1983009808
        %v1659 = vunpack.c.0.s8 %v1658
        %v1660 = vlaneseq
        %v1661 = vshrl.u32 %v1660, 7
        %v1662 = vsub.s32 %v1659, %v1661
        %v1663 = vrot.slane %v1656, %v1662
        %v1664 = vcombine.low %v1639, %v1647
        %v1666 = vunpack.c.l.s4 1934713408
        %v1667 = vunpack.c.0.s8 %v1666
        %v1668 = vlaneseq
        %v1669 = vshrl.u32 %v1668, 7
        %v1670 = vsub.s32 %v1667, %v1669
        %v1671 = vrot.slane %v1664, %v1670
        %v1672 = vcombine.low %v1655, %v1663
        %v1674 = vunpack.c.l.s4 1934713408
        %v1675 = vunpack.c.0.s8 %v1674
        %v1676 = vlaneseq
        %v1677 = vshrl.u32 %v1676, 7
        %v1678 = vsub.s32 %v1675, %v1677
        %v1679 = vrot.slane %v1672, %v1678
        %v1680 = vcombine.low %v1671, %v1679
        %v1681 = vcombine.high %v1671, %v1679
        %1683 = vrot.lane.b32.xlu0 %v1681, 16
        %v1684 = vpop.permute.xlu0 %1683
        %v1686 = vsel %vm1247, %v1680, %v1684
        %v1687 = vpack.c.bf16 %v1686, %v1686
        %v1688 = vld [vmem:[%s753] sm:$0xf]
        %v1689 = vld [vmem:[%s753 + $0x4] sm:$0xf]
        %v1690 = vld [vmem:[%s753 + $0x8] sm:$0xf]
        %v1691 = vld [vmem:[%s753 + $0xc] sm:$0xf]
        %v1692 = vld [vmem:[%s756] sm:$0x1]
        %v1694 = vlaneseq
        %v1695 = vshrl.u32 %v1694, 7
        %v1696 = vsub.s32 0, %v1695
        %v1697 = vrot.slane %v1692, %v1696
        %v1703 = vunpack.c.l.b16 %v1688
        %v1704 = vunpack.c.l.b16 %v1689
        %v1705 = vunpack.c.l.b16 %v1690
        %v1706 = vunpack.c.l.b16 %v1691
        %v1707 = vpack.c.b16 %v1704, %v1703
        %v1708 = vpack.c.b16 %v1706, %v1705
        %v1712 = vsel %vm781, %v1687, 0
        %1714 = vmatprep.subr.bf16.mxu0 0
        %1715 = vmatpush1.bf16.msra.mxu0 %v1707
        %1716 = vmatprep.subr.bf16.mxu0 0
        %1717 = vmatpush1.bf16.msra.mxu0 %v1708
        %1718 = vmatprep.subr.bf16.mxu0 0
        %1719 = vmatpush1.bf16.msra.mxu0 0
        %1720 = vmatprep.subr.bf16.mxu0 0
        %1721 = vmatpush1.bf16.msra.mxu0 0
        %1722 = vmatprep.subr.bf16.mxu0 0
        %1723 = vmatpush1.bf16.msra.mxu0 0
        %1724 = vmatprep.subr.bf16.mxu0 0
        %1725 = vmatpush1.bf16.msra.mxu0 0
        %1726 = vmatprep.subr.bf16.mxu0 0
        %1727 = vmatpush1.bf16.msra.mxu0 0
        %1728 = vmatprep.subr.bf16.mxu0 0
        %1729 = vmatpush1.bf16.msra.mxu0 0
        %1730 = vmatprep.subr.bf16.mxu0 0
        %1731 = vmatpush1.bf16.msra.mxu0 0
        %1732 = vmatprep.subr.bf16.mxu0 0
        %1733 = vmatpush1.bf16.msra.mxu0 0
        %1734 = vmatprep.subr.bf16.mxu0 0
        %1735 = vmatpush1.bf16.msra.mxu0 0
        %1736 = vmatprep.subr.bf16.mxu0 0
        %1737 = vmatpush1.bf16.msra.mxu0 0
        %1738 = vmatprep.subr.bf16.mxu0 0
        %1739 = vmatpush1.bf16.msra.mxu0 0
        %1740 = vmatprep.subr.bf16.mxu0 0
        %1741 = vmatpush1.bf16.msra.mxu0 0
        %1742 = vmatprep.subr.bf16.mxu0 0
        %1743 = vmatpush1.bf16.msra.mxu0 0
        %1744 = vmatprep.subr.bf16.mxu0 0
        %1745 = vmatpush1.bf16.msra.mxu0 0
        %1746 = vmatprep.mubr.bf16.mxu0 0
        %1747 = vmatmul.mubr.bf16.gmra.mrb[0].mxu0 %v1712
        %v1748 = vpop.f32.mrb[0].mxu0
        %v1749 = vadd.f32 %v1697, %v1748
        %v1750 = vpop.f32.mrb[0].mxu0
        %v1751 = vpop.f32.mrb[0].mxu0
        %v1752 = vpop.f32.mrb[0].mxu0
        %1753 = vdwg.mxu0
        %v1754 = vadd.f32 %v1749, %v778
        %v1755 = vld [vmem:[%s626] sm:$0x1]
        %v1756 = vld [vmem:[%s634] sm:$0x1]
        %v1757 = vsel %vm781, %v1754, 0.0
        %1758 = vadd.xlane.f32.xlu0 %v1757
        %v1759 = vpop.xlane.xlu0 %1758
        %v1760 = vmul.f32 %v1759, %v785
        %v1761 = vsub.f32 %v1754, %v1760
        %v1762 = vmul.f32 %v1761, %v1761
        %v1763 = vsel %vm781, %v1762, 0.0
        %1764 = vadd.xlane.f32.xlu0 %v1763
        %v1765 = vpop.xlane.xlu0 %1764
        %v1766 = vmul.f32 %v1765, %v785
        %v1767 = vadd.f32 %v1766, 1e-05
        %v1768 = vrsqrt.pop %v1767
        %v1769 = vmul.f32 %v1761, %v1768
        %v1771 = vlaneseq
        %v1772 = vshrl.u32 %v1771, 7
        %v1773 = vsub.s32 0, %v1772
        %v1774 = vrot.slane %v1755, %v1773
        %v1776 = vmul.f32 %v1769, %v1774
        %v1778 = vlaneseq
        %v1779 = vshrl.u32 %v1778, 7
        %v1780 = vsub.s32 0, %v1779
        %v1781 = vrot.slane %v1756, %v1780
        %v1783 = vadd.f32 %v1776, %v1781
        %v1784 = vpack.c.bf16 %v1783, %v1783
        %v1785 = vld [vmem:[%s761] sm:$0xf]
        %v1786 = vld [vmem:[%s761 + $0x4] sm:$0xf]
        %v1787 = vld [vmem:[%s761 + $0x8] sm:$0xf]
        %v1788 = vld [vmem:[%s761 + $0xc] sm:$0xf]
        %v1789 = vld [vmem:[%s642] sm:$0x1]
        %v1791 = vlaneseq
        %v1792 = vshrl.u32 %v1791, 7
        %v1793 = vsub.s32 0, %v1792
        %v1794 = vrot.slane %v1789, %v1793
        %v1800 = vunpack.c.l.b16 %v1785
        %v1801 = vunpack.c.l.b16 %v1786
        %v1802 = vunpack.c.l.b16 %v1787
        %v1803 = vunpack.c.l.b16 %v1788
        %v1804 = vpack.c.b16 %v1801, %v1800
        %v1805 = vpack.c.b16 %v1803, %v1802
        %v1809 = vsel %vm781, %v1784, 0
        %1811 = vmatprep.subr.bf16.mxu0 0
        %1812 = vmatpush1.bf16.msra.mxu0 %v1804
        %1813 = vmatprep.subr.bf16.mxu0 0
        %1814 = vmatpush1.bf16.msra.mxu0 %v1805
        %1815 = vmatprep.subr.bf16.mxu0 0
        %1816 = vmatpush1.bf16.msra.mxu0 0
        %1817 = vmatprep.subr.bf16.mxu0 0
        %1818 = vmatpush1.bf16.msra.mxu0 0
        %1819 = vmatprep.subr.bf16.mxu0 0
        %1820 = vmatpush1.bf16.msra.mxu0 0
        %1821 = vmatprep.subr.bf16.mxu0 0
        %1822 = vmatpush1.bf16.msra.mxu0 0
        %1823 = vmatprep.subr.bf16.mxu0 0
        %1824 = vmatpush1.bf16.msra.mxu0 0
        %1825 = vmatprep.subr.bf16.mxu0 0
        %1826 = vmatpush1.bf16.msra.mxu0 0
        %1827 = vmatprep.subr.bf16.mxu0 0
        %1828 = vmatpush1.bf16.msra.mxu0 0
        %1829 = vmatprep.subr.bf16.mxu0 0
        %1830 = vmatpush1.bf16.msra.mxu0 0
        %1831 = vmatprep.subr.bf16.mxu0 0
        %1832 = vmatpush1.bf16.msra.mxu0 0
        %1833 = vmatprep.subr.bf16.mxu0 0
        %1834 = vmatpush1.bf16.msra.mxu0 0
        %1835 = vmatprep.subr.bf16.mxu0 0
        %1836 = vmatpush1.bf16.msra.mxu0 0
        %1837 = vmatprep.subr.bf16.mxu0 0
        %1838 = vmatpush1.bf16.msra.mxu0 0
        %1839 = vmatprep.subr.bf16.mxu0 0
        %1840 = vmatpush1.bf16.msra.mxu0 0
        %1841 = vmatprep.subr.bf16.mxu0 0
        %1842 = vmatpush1.bf16.msra.mxu0 0
        %1843 = vmatprep.mubr.bf16.mxu0 0
        %1844 = vmatmul.mubr.bf16.gmra.mrb[0].mxu0 %v1809
        %v1845 = vpop.f32.mrb[0].mxu0
        %v1846 = vadd.f32 %v1794, %v1845
        %v1847 = vpop.f32.mrb[0].mxu0
        %v1848 = vpop.f32.mrb[0].mxu0
        %v1849 = vpop.f32.mrb[0].mxu0
        %1850 = vdwg.mxu0
        %v1851 = vmul.f32 %v1846, 0.5
        %v1852 = vmul.f32 %v1846, 0.70710677
        %vm1853 = vcmp.ge.f32.partialorder %v1852, 0.0
        %v1854 = vsel %vm1853, 1.0, -1.0
        %v1855 = vand.u32 2147483647, %v1852
        %v1856 = vmul.f32 %v1855, 0.3275911
        %v1857 = vadd.f32 %v1856, 1.0
        %v1858 = vrcp.pop %v1857
        %v1859 = vmul.f32 %v1858, 1.0614054
        %v1860 = vadd.f32 %v1859, -1.4531521
        %v1861 = vmul.f32 %v1860, %v1858
        %v1862 = vadd.f32 %v1861, 1.4214138
        %v1863 = vmul.f32 %v1862, %v1858
        %v1864 = vadd.f32 %v1863, -0.28449672
        %v1865 = vmul.f32 %v1864, %v1858
        %v1866 = vadd.f32 %v1865, 0.2548296
        %v1867 = vmul.f32 %v1866, %v1858
        %v1868 = vsub.f32 0.0, %v1855
        %v1869 = vmul.f32 %v1868, %v1855
        %v1870 = vmul.f32 %v1869, 1.442695
        %v1871 = vpow.pop %v1870
        %v1872 = vmul.f32 %v1867, %v1871
        %v1873 = vsub.f32 1.0, %v1872
        %v1874 = vmul.f32 %v1854, %v1873
        %v1875 = vadd.f32 %v1874, 1.0
        %v1876 = vmul.f32 %v1851, %v1875
        %v1877 = vpack.c.bf16 %v1876, %v1876
        %v1878 = vld [vmem:[%s766] sm:$0xf]
        %v1879 = vld [vmem:[%s766 + $0x4] sm:$0xf]
        %v1880 = vld [vmem:[%s766 + $0x8] sm:$0xf]
        %v1881 = vld [vmem:[%s766 + $0xc] sm:$0xf]
        %v1882 = vld [vmem:[%s766 + $0x10] sm:$0xf]
        %v1883 = vld [vmem:[%s766 + $0x14] sm:$0xf]
        %v1884 = vld [vmem:[%s766 + $0x18] sm:$0xf]
        %v1885 = vld [vmem:[%s766 + $0x1c] sm:$0xf]
        %v1886 = vld [vmem:[%s769] sm:$0x1]
        %v1888 = vlaneseq
        %v1889 = vshrl.u32 %v1888, 7
        %v1890 = vsub.s32 0, %v1889
        %v1891 = vrot.slane %v1886, %v1890
        %v1901 = vunpack.c.l.b16 %v1878
        %v1902 = vunpack.c.l.b16 %v1879
        %v1903 = vunpack.c.l.b16 %v1880
        %v1904 = vunpack.c.l.b16 %v1881
        %v1905 = vunpack.c.l.b16 %v1882
        %v1906 = vunpack.c.l.b16 %v1883
        %v1907 = vunpack.c.l.b16 %v1884
        %v1908 = vunpack.c.l.b16 %v1885
        %v1909 = vpack.c.b16 %v1902, %v1901
        %v1910 = vpack.c.b16 %v1904, %v1903
        %v1911 = vpack.c.b16 %v1906, %v1905
        %v1912 = vpack.c.b16 %v1908, %v1907
        %vm1917 = vcmask 523264
        %v1919 = vsel %vm1917, %v1877, 0
        %1921 = vmatprep.subr.bf16.mxu0 0
        %1922 = vmatpush1.bf16.msra.mxu0 %v1909
        %1923 = vmatprep.subr.bf16.mxu0 0
        %1924 = vmatpush1.bf16.msra.mxu0 %v1910
        %1925 = vmatprep.subr.bf16.mxu0 0
        %1926 = vmatpush1.bf16.msra.mxu0 %v1911
        %1927 = vmatprep.subr.bf16.mxu0 0
        %1928 = vmatpush1.bf16.msra.mxu0 %v1912
        %1929 = vmatprep.subr.bf16.mxu0 0
        %1930 = vmatpush1.bf16.msra.mxu0 0
        %1931 = vmatprep.subr.bf16.mxu0 0
        %1932 = vmatpush1.bf16.msra.mxu0 0
        %1933 = vmatprep.subr.bf16.mxu0 0
        %1934 = vmatpush1.bf16.msra.mxu0 0
        %1935 = vmatprep.subr.bf16.mxu0 0
        %1936 = vmatpush1.bf16.msra.mxu0 0
        %1937 = vmatprep.subr.bf16.mxu0 0
        %1938 = vmatpush1.bf16.msra.mxu0 0
        %1939 = vmatprep.subr.bf16.mxu0 0
        %1940 = vmatpush1.bf16.msra.mxu0 0
        %1941 = vmatprep.subr.bf16.mxu0 0
        %1942 = vmatpush1.bf16.msra.mxu0 0
        %1943 = vmatprep.subr.bf16.mxu0 0
        %1944 = vmatpush1.bf16.msra.mxu0 0
        %1945 = vmatprep.subr.bf16.mxu0 0
        %1946 = vmatpush1.bf16.msra.mxu0 0
        %1947 = vmatprep.subr.bf16.mxu0 0
        %1948 = vmatpush1.bf16.msra.mxu0 0
        %1949 = vmatprep.subr.bf16.mxu0 0
        %1950 = vmatpush1.bf16.msra.mxu0 0
        %1951 = vmatprep.subr.bf16.mxu0 0
        %1952 = vmatpush1.bf16.msra.mxu0 0
        %1953 = vmatprep.mubr.bf16.mxu0 0
        %1954 = vmatmul.mubr.bf16.gmra.mrb[0].mxu0 %v1919
        %v1955 = vpop.f32.mrb[0].mxu0
        %v1956 = vadd.f32 %v1891, %v1955
        %v1957 = vpop.f32.mrb[0].mxu0
        %v1958 = vpop.f32.mrb[0].mxu0
        %v1959 = vpop.f32.mrb[0].mxu0
        %1960 = vdwg.mxu0
        %v1961 = vadd.f32 %v1956, %v1754
        %1962 = vst.msk [vmem:[#allocation2] sm:$0xff] %vm781, %v1961
        %p1963 = scmp.eq.s32.totalorder %s43, 1
        // Predicated region
        $region101: #{tpu_custom_call.1} parent=79 // pred_check
          %p1964 = pneg %p1963
        $region102: #{tpu_custom_call.1} parent=79 // pred_check_branch
          %1966 = sbr.rel (%p1964) target = $region104
        $region103: #{tpu_custom_call.1} parent=79 // pred_region
          %v1967 = vld [vmem:[%s13] sm:$0x1]
          %v1968 = vld [vmem:[%s14] sm:$0x1]
          %vm1969 = vcmask 261127
          %v1970 = vsel %vm1969, %v1961, 0.0
          %1971 = vadd.xlane.f32.xlu0 %v1970
          %v1972 = vpop.xlane.xlu0 %1971
          %v1973 = vmul.f32 %v1972, %v785
          %v1974 = vsub.f32 %v1961, %v1973
          %v1975 = vmul.f32 %v1974, %v1974
          %v1976 = vsel %vm1969, %v1975, 0.0
          %1977 = vadd.xlane.f32.xlu0 %v1976
          %v1978 = vpop.xlane.xlu0 %1977
          %v1979 = vmul.f32 %v1978, %v785
          %v1980 = vadd.f32 %v1979, 1e-05
          %v1981 = vrsqrt.pop %v1980
          %v1982 = vmul.f32 %v1974, %v1981
          %v1984 = vlaneseq
          %v1985 = vshrl.u32 %v1984, 7
          %v1986 = vsub.s32 0, %v1985
          %v1987 = vrot.slane %v1967, %v1986
          %v1989 = vmul.f32 %v1982, %v1987
          %v1991 = vlaneseq
          %v1992 = vshrl.u32 %v1991, 7
          %v1993 = vsub.s32 0, %v1992
          %v1994 = vrot.slane %v1968, %v1993
          %v1996 = vadd.f32 %v1989, %v1994
          %1997 = vst.msk [vmem:[%s734 - $0x7] sm:$0x80] %vm1969, %v1996
        $region104: #{tpu_custom_call.1} parent=79 // pred_fallthru
          _
        %s1998 = sand.u32 %s438, 1
        %s1999 = scalar_lea.sflag [#allocation5], %s1998
        %s2000 = sand.u32 %s438, 1
        %s2001 = scalar_lea.vmem [#allocation11], %s2000
        // Predicated region
        $region105: #{tpu_custom_call.1} parent=79 // pred_check
          %p2002 = pneg %p448
        $region106: #{tpu_custom_call.1} parent=79 // pred_check_branch
          %2004 = sbr.rel (%p2002) target = $region108
        $region107: #{tpu_custom_call.1} parent=79 // pred_region
          %s2006 = ssub.s32 16, 16
          %2007 = vsyncadd %s1999, %s2006
          %s2008 = smul.addr %s42, 16
          %s2009 = scalar_lea.hbm %s15, %s2008
          %s2011 = sshll.u32 %s2001, 4
          %s2012 = int_to_ptr.vmem [resolvable:$true] %s2011
          %2014 = dma.vmem_to_hbm [thread:$0]  %s2012, 16, %s2009, %s1999
        $region108: #{tpu_custom_call.1} parent=79 // pred_fallthru
          _
      $region80: #{tpu_custom_call.1} parent=5 // pred_fallthru
        _
      %p2015 = scmp.le.s32.totalorder 2, %s33
      // Predicated region
      $region109: #{tpu_custom_call.1} parent=5 // pred_check
        %p2016 = pneg %p2015
      $region110: #{tpu_custom_call.1} parent=5 // pred_check_branch
        %2018 = sbr.rel (%p2016) target = $region112
      $region111: #{tpu_custom_call.1} parent=5 // pred_region
        %s2019 = ssub.s32 %s33, 2
        // Predicated region
        $region113: #{tpu_custom_call.1} parent=111 // pred_check
          %p2020 = pneg %p454
        $region114: #{tpu_custom_call.1} parent=111 // pred_check_branch
          %2022 = sbr.rel (%p2020) target = $region116
        $region115: #{tpu_custom_call.1} parent=111 // pred_region
          %s2023 = sand.u32 %s439, 1
          %s2024 = scalar_lea.sflag [#allocation5], %s2023
          %s2025 = sand.u32 %s439, 1
          %s2026 = scalar_lea.vmem [#allocation11], %s2025
          %2027 = dma.done %s2024, 16
        $region116: #{tpu_custom_call.1} parent=111 // pred_fallthru
          _
      $region112: #{tpu_custom_call.1} parent=5 // pred_fallthru
        _
    $region6: #{tpu_custom_call.1} parent=1 // loop_footer
      %s37 = sadd.s32 1, %s33
    $region7: #{tpu_custom_call.1} parent=1 // loop_footer_branch
      %32 = sbr.rel target = $region3
    $region8: #{tpu_custom_call.1} parent=1 // loop_exit
      _
    %2028 = vsyncpa [#allocation4], 1
    %s2029 = scalar_lea.sflag [#allocation4], 1
    %2030 = vsyncpa %s2029, 1
    %2031 = vsyncpa [#allocation7], 1
    %s2032 = scalar_lea.sflag [#allocation7], 1
    %2033 = vsyncpa %s2032, 1
    %2034 = vsyncpa [#allocation10], 1
    %s2035 = scalar_lea.sflag [#allocation10], 1
    %2036 = vsyncpa %s2035, 1
    %2037 = vsyncpa [#allocation5], 1
    %s2038 = scalar_lea.sflag [#allocation5], 1
    %2039 = vsyncpa %s2038, 1

</llo_original>
